<compile_context>
chip_gen: v7x
topology: tpu7x:2x2x1
jax: 0.10.0
libtpu: 0.0.40
codegen_flags: <defaults>
</compile_context>

<pallas_src>
import functools
import math

import jax
import jax.numpy as jnp
import numpy as np
from jax.experimental import pallas as pl
from jax.experimental.pallas import tpu as pltpu

LN_EPS = 1e-5
NEG_INF = -1e9


def _layer_norm(x, gamma, beta):
    mean = jnp.mean(x, axis=-1, keepdims=True)
    var = jnp.mean(jnp.square(x - mean), axis=-1, keepdims=True)
    return (x - mean) * jax.lax.rsqrt(var + LN_EPS) * gamma + beta


# ---------------------------------------------------------------------------
# Per-(batch, layer) kernel: one encoder block, activation carried in VMEM
# ---------------------------------------------------------------------------
def encoder_layer_kernel(num_heads, compute_dtype,
                         x_ref, mask_ref,
                         ln1_g_ref, ln1_b_ref, wqkv_ref, bqkv_ref, wo_ref, bo_ref,
                         ln2_g_ref, ln2_b_ref, w1_ref, b1_ref, w2_ref, b2_ref,
                         fin_g_ref, fin_b_ref,
                         out_ref, x_carry):
    f32 = jnp.float32
    cdt = compute_dtype

    l = pl.program_id(1)
    num_layers = pl.num_programs(1)

    S, D = x_carry.shape
    H = num_heads
    dh = D // H

    @pl.when(l == 0)
    def _():
        x_carry[...] = x_ref[...].astype(f32)

    x = x_carry[...]                                     # (S, D) f32 residual stream

    # ---- sub-layer 1: pre-LN multi-head self-attention + residual -----------
    h = _layer_norm(x, ln1_g_ref[...], ln1_b_ref[...])
    # fused QKV projection: single (S, D) @ (D, 3D) matmul, f32 accumulation.
    qkv = jnp.dot(h.astype(cdt), wqkv_ref[...],
                  preferred_element_type=f32) + bqkv_ref[...]        # (S, 3D)
    # Q columns (and bq) were pre-scaled by 1/sqrt(dh) at pack time.
    q = qkv[:, 0 * D:1 * D].astype(cdt)
    k = qkv[:, 1 * D:2 * D].astype(cdt)
    v = qkv[:, 2 * D:3 * D].astype(cdt)
    # recover heads on the leading axis (batched dots over a single head axis).
    qh = jnp.swapaxes(q.reshape(S, H, dh), 0, 1)         # (H, S, dh)
    kh = jnp.swapaxes(k.reshape(S, H, dh), 0, 1)
    vh = jnp.swapaxes(v.reshape(S, H, dh), 0, 1)

    # TODO(synk): at production S, block over keys with online softmax (flash
    # pattern) so the (H, S, S) scores tensor is never fully materialized.
    scores = jnp.einsum('hqd,hkd->hqk', qh, kh,
                        preferred_element_type=f32)                  # (H, S, S)
    keep = mask_ref[...] > 0.0                                       # (1, S)
    scores = jnp.where(keep[None, :, :], scores, NEG_INF)
    scores = scores - jnp.max(scores, axis=-1, keepdims=True)
    p = jnp.exp(scores)
    inv = pl.reciprocal(jnp.sum(p, axis=-1, keepdims=True), approx=True)
    p = p * inv
    o = jnp.einsum('hqk,hkd->hqd', p.astype(cdt), vh,
                   preferred_element_type=f32)                       # (H, S, dh)
    # merge heads back onto the lane axis; one output projection so the head
    # reduction happens inside the MXU f32 accumulator (no (H, S, D) temp).
    o2 = jnp.swapaxes(o.astype(cdt), 0, 1).reshape(S, D)             # (S, D)
    attn = jnp.dot(o2, wo_ref[...], preferred_element_type=f32) + bo_ref[...]
    x = x + attn                        # dropout = identity (inference mode)

    # ---- sub-layer 2: pre-LN position-wise feed-forward + residual ----------
    # TODO(synk): at production D/d_ff, stream w1/w2 in K/N tiles (extra grid
    # axis or pltpu.emit_pipeline) instead of holding the full FFN weights.
    h2 = _layer_norm(x, ln2_g_ref[...], ln2_b_ref[...])
    ff = jnp.dot(h2.astype(cdt), w1_ref[...], preferred_element_type=f32) + b1_ref[...]
    ff = jnp.maximum(ff, 0.0)
    ff = jnp.dot(ff.astype(cdt), w2_ref[...], preferred_element_type=f32) + b2_ref[...]
    x = x + ff

    x_carry[...] = x

    @pl.when(l == num_layers - 1)
    def _():
        out_ref[...] = _layer_norm(x, fin_g_ref[...],
                                   fin_b_ref[...]).astype(out_ref.dtype)


# ---------------------------------------------------------------------------
# Parameter packing (host-side, one-time layout plumbing)
# ---------------------------------------------------------------------------
def pack_encoder_params(block_params, num_heads, compute_dtype):
    """Stack per-layer params along a leading L axis (streamed via BlockSpec),
    fuse wq/wk/wv into (D, 3D), fold 1/sqrt(dh) into the Q columns/bias, and
    store matmul weight operands in compute_dtype (bf16 halves DMA/VMEM)."""
    dim = block_params[0]["wq"].shape[0]
    dh = dim // num_heads
    scale = 1.0 / math.sqrt(dh)
    wdt = compute_dtype

    wqkv = [jnp.concatenate([p["wq"] * scale, p["wk"], p["wv"]], axis=-1)
            for p in block_params]                                    # (D, 3D)
    bqkv = [jnp.concatenate([p["bq"] * scale, p["bk"], p["bv"]], axis=-1)
            for p in block_params]                                    # (1, 3D)

    def stack(key, dt=jnp.float32):
        return jnp.stack([p[key].astype(dt) for p in block_params], axis=0)

    return dict(
        ln1_g=stack("ln1_g"), ln1_b=stack("ln1_b"),
        wqkv=jnp.stack(wqkv).astype(wdt), bqkv=jnp.stack(bqkv),
        wo=stack("wo", wdt), bo=stack("bo"),
        ln2_g=stack("ln2_g"), ln2_b=stack("ln2_b"),
        w1=stack("w1", wdt), b1=stack("b1"),
        w2=stack("w2", wdt), b2=stack("b2"),
    )


def _vmem_limit_bytes():
    """Generation-aware scoped-VMEM request (~3/4 of per-core VMEM, capped)."""
    try:
        cap = int(pltpu.get_tpu_info().vmem_capacity_bytes)
    except Exception:
        return None                      # fall back to the compiler default
    return int(min(3 * cap // 4, 96 * 1024 * 1024))


# ---------------------------------------------------------------------------
# Wrapper: single pallas_call over grid (batch, layer)
# ---------------------------------------------------------------------------
def encoder_forward(x, x_mask, block_params, final_g, final_b, num_heads,
                    compute_dtype=jnp.bfloat16):
    B, S, D = x.shape
    L = len(block_params)
    packed = pack_encoder_params(block_params, num_heads, compute_dtype)

    # tiny per-batch key-padding keep vector (no (B*S, B*S) bias materialized)
    keep = (x_mask.reshape(B, S) > 0).astype(jnp.float32).reshape(B, 1, S)

    def layer_spec(arr):                 # stacked (L, a, b): one layer per step
        _, a, b = arr.shape
        return pl.BlockSpec((None, a, b), lambda bb, ll: (ll, 0, 0))

    in_specs = [
        pl.BlockSpec((None, S, D), lambda bb, ll: (bb, 0, 0)),   # x (per batch)
        pl.BlockSpec((None, 1, S), lambda bb, ll: (bb, 0, 0)),   # keep mask
        layer_spec(packed["ln1_g"]), layer_spec(packed["ln1_b"]),
        layer_spec(packed["wqkv"]), layer_spec(packed["bqkv"]),
        layer_spec(packed["wo"]), layer_spec(packed["bo"]),
        layer_spec(packed["ln2_g"]), layer_spec(packed["ln2_b"]),
        layer_spec(packed["w1"]), layer_spec(packed["b1"]),
        layer_spec(packed["w2"]), layer_spec(packed["b2"]),
        pl.BlockSpec((1, D), lambda bb, ll: (0, 0)),             # final gamma
        pl.BlockSpec((1, D), lambda bb, ll: (0, 0)),             # final beta
    ]
    out_spec = pl.BlockSpec((None, S, D), lambda bb, ll: (bb, 0, 0))

    out = pl.pallas_call(
        functools.partial(encoder_layer_kernel, num_heads, compute_dtype),
        out_shape=jax.ShapeDtypeStruct((B, S, D), x.dtype),
        grid_spec=pltpu.PrefetchScalarGridSpec(
            num_scalar_prefetch=0,
            grid=(B, L),                     # batch (parallel) x layer (carried)
            in_specs=in_specs,
            out_specs=out_spec,
            scratch_shapes=[pltpu.VMEM((S, D), jnp.float32)],
        ),
        compiler_params=pltpu.CompilerParams(
            dimension_semantics=("parallel", "arbitrary"),
            vmem_limit_bytes=_vmem_limit_bytes(),
        ),
    )(x, keep,
      packed["ln1_g"], packed["ln1_b"], packed["wqkv"], packed["bqkv"],
      packed["wo"], packed["bo"], packed["ln2_g"], packed["ln2_b"],
      packed["w1"], packed["b1"], packed["w2"], packed["b2"],
      final_g, final_b)
    return out


# ---------------------------------------------------------------------------
# Deterministic parameter init (synthetic weights, no checkpoint load)
# ---------------------------------------------------------------------------
def init_block_params(key, dim_embed, dim_pwff):
    ks = jax.random.split(key, 8)
    s = 0.02
    return {
        "ln1_g": 1.0 + 0.1 * jax.random.normal(ks[0], (1, dim_embed), jnp.float32),
        "ln1_b": 0.01 * jax.random.normal(ks[1], (1, dim_embed), jnp.float32),
        "wq": s * jax.random.normal(ks[2], (dim_embed, dim_embed), jnp.float32),
        "bq": jnp.zeros((1, dim_embed), jnp.float32),
        "wk": s * jax.random.normal(ks[3], (dim_embed, dim_embed), jnp.float32),
        "bk": jnp.zeros((1, dim_embed), jnp.float32),
        "wv": s * jax.random.normal(ks[4], (dim_embed, dim_embed), jnp.float32),
        "bv": jnp.zeros((1, dim_embed), jnp.float32),
        "wo": s * jax.random.normal(ks[5], (dim_embed, dim_embed), jnp.float32),
        "bo": jnp.zeros((1, dim_embed), jnp.float32),
        "ln2_g": 1.0 + 0.1 * jax.random.normal(ks[6], (1, dim_embed), jnp.float32),
        "ln2_b": 0.01 * jax.random.normal(ks[7], (1, dim_embed), jnp.float32),
        "w1": s * jax.random.normal(jax.random.fold_in(key, 100),
                                    (dim_embed, dim_pwff), jnp.float32),
        "b1": jnp.zeros((1, dim_pwff), jnp.float32),
        "w2": s * jax.random.normal(jax.random.fold_in(key, 101),
                                    (dim_pwff, dim_embed), jnp.float32),
        "b2": jnp.zeros((1, dim_embed), jnp.float32),
    }


# ---------------------------------------------------------------------------
# Pure-JAX reference (mirrors the PyTorch forward, dropout = identity)
# ---------------------------------------------------------------------------
def encoder_reference(x, mask, block_params, final_g, final_b, num_heads):
    def ln(t, g, b):
        mu = t.mean(-1, keepdims=True)
        var = ((t - mu) ** 2).mean(-1, keepdims=True)
        return (t - mu) / jnp.sqrt(var + LN_EPS) * g + b

    B, S, D = x.shape
    dh = D // num_heads
    for p in block_params:
        h = ln(x, p["ln1_g"], p["ln1_b"])
        q = h @ p["wq"] + p["bq"]
        k = h @ p["wk"] + p["bk"]
        v = h @ p["wv"] + p["bv"]
        qh = q.reshape(B, S, num_heads, dh).transpose(0, 2, 1, 3)
        kh = k.reshape(B, S, num_heads, dh).transpose(0, 2, 1, 3)
        vh = v.reshape(B, S, num_heads, dh).transpose(0, 2, 1, 3)
        scores = jnp.einsum("bhqd,bhkd->bhqk", qh, kh) / math.sqrt(dh)
        scores = jnp.where(mask > 0, scores, NEG_INF)
        p_attn = jax.nn.softmax(scores, axis=-1)
        o = jnp.einsum("bhqk,bhkd->bhqd", p_attn, vh)
        o = o.transpose(0, 2, 1, 3).reshape(B, S, D)
        x = x + (o @ p["wo"] + p["bo"])
        h2 = ln(x, p["ln2_g"], p["ln2_b"])
        ff = jnp.maximum(h2 @ p["w1"] + p["b1"], 0.0) @ p["w2"] + p["b2"]
        x = x + ff
    return ln(x, final_g, final_b)


# ---------------------------------------------------------------------------
if __name__ == "__main__":
    num_blocks, num_heads = 2, 4
    dim_embed, dim_pwff = 32, 64
    B, S = 2, 8

    root = jax.random.PRNGKey(0)
    kx, kp, kf = jax.random.split(root, 3)

    x = jax.random.normal(kx, (B, S, dim_embed), jnp.float32)
    # padding mask: first batch attends to all 8 tokens, second only to first 5
    lengths = jnp.array([S, 5])
    x_mask = (jnp.arange(S)[None, :] < lengths[:, None]).astype(jnp.float32)
    x_mask = x_mask[:, None, None, :]                       # (B, 1, 1, S)

    block_keys = jax.random.split(kp, num_blocks)
    block_params = [init_block_params(k, dim_embed, dim_pwff) for k in block_keys]
    final_g = 1.0 + 0.1 * jax.random.normal(kf, (1, dim_embed), jnp.float32)
    final_b = 0.01 * jax.random.normal(jax.random.fold_in(kf, 1),
                                       (1, dim_embed), jnp.float32)

    ref = encoder_reference(x, x_mask, block_params, final_g, final_b, num_heads)

    # f32 matmul operands (tight tolerance; approx reciprocal ~1e-3 is intentional)
    out_f32 = encoder_forward(x, x_mask, block_params, final_g, final_b, num_heads,
                              compute_dtype=jnp.float32)
    out_f32 = jax.block_until_ready(out_f32)
    np.testing.assert_allclose(np.asarray(out_f32), np.asarray(ref),
                               rtol=2e-3, atol=2e-3)

    # bf16 matmul operands / bf16 HBM weights + f32 accumulation (default path)
    out_bf16 = encoder_forward(x, x_mask, block_params, final_g, final_b, num_heads)
    out_bf16 = jax.block_until_ready(out_bf16)
    np.testing.assert_allclose(np.asarray(out_bf16), np.asarray(ref),
                               rtol=3e-2, atol=3e-2)

    # TODO(synk): nn.Dropout(drop_prob) is intentionally identity (inference mode).
    print("KERNEL_OK")
</pallas_src>

<mosaic_0001>
module attributes {stable_mosaic.version = 11 : i64} {
  func.func @encoder_layer_kernel(%arg0: i32, %arg1: i32, %arg2: memref<1x8x32xf32, #tpu.memory_space<vmem>>, %arg3: memref<1x1x8xf32, #tpu.memory_space<vmem>>, %arg4: memref<1x1x32xf32, #tpu.memory_space<vmem>>, %arg5: memref<1x1x32xf32, #tpu.memory_space<vmem>>, %arg6: memref<1x32x96xf32, #tpu.memory_space<vmem>>, %arg7: memref<1x1x96xf32, #tpu.memory_space<vmem>>, %arg8: memref<1x32x32xf32, #tpu.memory_space<vmem>>, %arg9: memref<1x1x32xf32, #tpu.memory_space<vmem>>, %arg10: memref<1x1x32xf32, #tpu.memory_space<vmem>>, %arg11: memref<1x1x32xf32, #tpu.memory_space<vmem>>, %arg12: memref<1x32x64xf32, #tpu.memory_space<vmem>>, %arg13: memref<1x1x64xf32, #tpu.memory_space<vmem>>, %arg14: memref<1x64x32xf32, #tpu.memory_space<vmem>>, %arg15: memref<1x1x32xf32, #tpu.memory_space<vmem>>, %arg16: memref<1x32xf32, #tpu.memory_space<vmem>>, %arg17: memref<1x32xf32, #tpu.memory_space<vmem>>, %arg18: memref<1x8x32xf32, #tpu.memory_space<vmem>>, %arg19: memref<8x32xf32, #tpu.memory_space<vmem>>) attributes {dimension_semantics = [#tpu.dimension_semantics<parallel>, #tpu.dimension_semantics<arbitrary>], iteration_bounds = array<i64: 2, 2>, scalar_prefetch = 0 : i64, scratch_operands = 1 : i64, tpu.core_type = #tpu.core_type<tc>, window_params = [{transform_indices = @transform_0, window_bounds = array<i64: 1, 8, 32>}, {transform_indices = @transform_1, window_bounds = array<i64: 1, 1, 8>}, {transform_indices = @transform_2, window_bounds = array<i64: 1, 1, 32>}, {transform_indices = @transform_3, window_bounds = array<i64: 1, 1, 32>}, {transform_indices = @transform_4, window_bounds = array<i64: 1, 32, 96>}, {transform_indices = @transform_5, window_bounds = array<i64: 1, 1, 96>}, {transform_indices = @transform_6, window_bounds = array<i64: 1, 32, 32>}, {transform_indices = @transform_7, window_bounds = array<i64: 1, 1, 32>}, {transform_indices = @transform_8, window_bounds = array<i64: 1, 1, 32>}, {transform_indices = @transform_9, window_bounds = array<i64: 1, 1, 32>}, {transform_indices = @transform_10, window_bounds = array<i64: 1, 32, 64>}, {transform_indices = @transform_11, window_bounds = array<i64: 1, 1, 64>}, {transform_indices = @transform_12, window_bounds = array<i64: 1, 64, 32>}, {transform_indices = @transform_13, window_bounds = array<i64: 1, 1, 32>}, {pipeline_mode = #tpu.pipeline_mode<synchronous>, transform_indices = @transform_14, window_bounds = array<i64: 1, 32>}, {pipeline_mode = #tpu.pipeline_mode<synchronous>, transform_indices = @transform_15, window_bounds = array<i64: 1, 32>}, {transform_indices = @transform_16, window_bounds = array<i64: 1, 8, 32>}]} {
    %c0_i32 = arith.constant 0 : i32
    %0 = arith.cmpi eq, %arg1, %c0_i32 : i32
    %1 = arith.extui %0 : i1 to i32
    %c0_i32_0 = arith.constant 0 : i32
    %2 = arith.cmpi ne, %1, %c0_i32_0 : i32
    scf.if %2 {
      %c0_64 = arith.constant 0 : index
      %c0_65 = arith.constant 0 : index
      %c0_66 = arith.constant 0 : index
      %124 = vector.load %arg2[%c0_64, %c0_65, %c0_66] : memref<1x8x32xf32, #tpu.memory_space<vmem>>, vector<1x8x32xf32>
      %125 = vector.shape_cast %124 : vector<1x8x32xf32> to vector<8x32xf32>
      %c0_67 = arith.constant 0 : index
      %c0_68 = arith.constant 0 : index
      %126 = vector.load %arg19[%c0_67, %c0_68] : memref<8x32xf32, #tpu.memory_space<vmem>>, vector<8x32xf32>
      tpu.vector_store %arg19[%c0_67, %c0_68], %125 {strides = array<i32>} : memref<8x32xf32, #tpu.memory_space<vmem>>, vector<8x32xf32>,
    } else {
    }
    %c0 = arith.constant 0 : index
    %c0_1 = arith.constant 0 : index
    %3 = vector.load %arg19[%c0, %c0_1] : memref<8x32xf32, #tpu.memory_space<vmem>>, vector<8x32xf32>
    %c0_2 = arith.constant 0 : index
    %c0_3 = arith.constant 0 : index
    %c0_4 = arith.constant 0 : index
    %4 = vector.load %arg4[%c0_2, %c0_3, %c0_4] : memref<1x1x32xf32, #tpu.memory_space<vmem>>, vector<1x1x32xf32>
    %5 = vector.shape_cast %4 : vector<1x1x32xf32> to vector<1x32xf32>
    %c0_5 = arith.constant 0 : index
    %c0_6 = arith.constant 0 : index
    %c0_7 = arith.constant 0 : index
    %6 = vector.load %arg5[%c0_5, %c0_6, %c0_7] : memref<1x1x32xf32, #tpu.memory_space<vmem>>, vector<1x1x32xf32>
    %7 = vector.shape_cast %6 : vector<1x1x32xf32> to vector<1x32xf32>
    %cst = arith.constant dense<0.000000e+00> : vector<8xf32>
    %8 = vector.multi_reduction <add>, %3, %cst [1] : vector<8x32xf32> to vector<8xf32>
    %9 = vector.shape_cast %8 : vector<8xf32> to vector<8x1xf32>
    %cst_8 = arith.constant 3.200000e+01 : f32
    %10 = vector.broadcast %cst_8 : f32 to vector<8x1xf32>
    %11 = arith.divf %9, %10 : vector<8x1xf32>
    %12 = vector.broadcast %11 : vector<8x1xf32> to vector<8x32xf32>
    %13 = arith.subf %3, %12 : vector<8x32xf32>
    %14 = arith.mulf %13, %13 : vector<8x32xf32>
    %cst_9 = arith.constant dense<0.000000e+00> : vector<8xf32>
    %15 = vector.multi_reduction <add>, %14, %cst_9 [1] : vector<8x32xf32> to vector<8xf32>
    %16 = vector.shape_cast %15 : vector<8xf32> to vector<8x1xf32>
    %cst_10 = arith.constant 3.200000e+01 : f32
    %17 = vector.broadcast %cst_10 : f32 to vector<8x1xf32>
    %18 = arith.divf %16, %17 : vector<8x1xf32>
    %19 = vector.broadcast %11 : vector<8x1xf32> to vector<8x32xf32>
    %20 = arith.subf %3, %19 : vector<8x32xf32>
    %cst_11 = arith.constant 9.99999974E-6 : f32
    %21 = vector.broadcast %cst_11 : f32 to vector<8x1xf32>
    %22 = arith.addf %18, %21 : vector<8x1xf32>
    %23 = math.rsqrt %22 : vector<8x1xf32>
    %24 = vector.broadcast %23 : vector<8x1xf32> to vector<8x32xf32>
    %25 = arith.mulf %20, %24 : vector<8x32xf32>
    %26 = vector.broadcast %5 : vector<1x32xf32> to vector<8x32xf32>
    %27 = arith.mulf %25, %26 : vector<8x32xf32>
    %28 = vector.broadcast %7 : vector<1x32xf32> to vector<8x32xf32>
    %29 = arith.addf %27, %28 : vector<8x32xf32>
    %c0_12 = arith.constant 0 : index
    %c0_13 = arith.constant 0 : index
    %c0_14 = arith.constant 0 : index
    %30 = vector.load %arg6[%c0_12, %c0_13, %c0_14] : memref<1x32x96xf32, #tpu.memory_space<vmem>>, vector<1x32x96xf32>
    %31 = vector.shape_cast %30 : vector<1x32x96xf32> to vector<32x96xf32>
    %cst_15 = arith.constant dense<0.000000e+00> : vector<8x96xf32>
    %32 = tpu.matmul %29, %31, %cst_15 {dimension_numbers = #tpu.dot_dimension_numbers<[1], [0], [0], [1], [0, 0, 1, 1], [], []>} : vector<8x32xf32>, vector<32x96xf32>, vector<8x96xf32> -> vector<8x96xf32>
    %c0_16 = arith.constant 0 : index
    %c0_17 = arith.constant 0 : index
    %c0_18 = arith.constant 0 : index
    %33 = vector.load %arg7[%c0_16, %c0_17, %c0_18] : memref<1x1x96xf32, #tpu.memory_space<vmem>>, vector<1x1x96xf32>
    %34 = vector.shape_cast %33 : vector<1x1x96xf32> to vector<1x96xf32>
    %35 = vector.broadcast %34 : vector<1x96xf32> to vector<8x96xf32>
    %36 = arith.addf %32, %35 : vector<8x96xf32>
    %37 = vector.extract_strided_slice %36 {offsets = [0, 0], sizes = [8, 32], strides = [1, 1]} : vector<8x96xf32> to vector<8x32xf32>
    %38 = vector.extract_strided_slice %36 {offsets = [0, 32], sizes = [8, 32], strides = [1, 1]} : vector<8x96xf32> to vector<8x32xf32>
    %39 = vector.extract_strided_slice %36 {offsets = [0, 64], sizes = [8, 32], strides = [1, 1]} : vector<8x96xf32> to vector<8x32xf32>
    %40 = vector.shape_cast %37 : vector<8x32xf32> to vector<8x4x8xf32>
    %41 = tpu.transpose %40, [1, 0, 2] : vector<8x4x8xf32> -> vector<4x8x8xf32>
    %42 = vector.shape_cast %38 : vector<8x32xf32> to vector<8x4x8xf32>
    %43 = tpu.transpose %42, [1, 0, 2] : vector<8x4x8xf32> -> vector<4x8x8xf32>
    %44 = vector.shape_cast %39 : vector<8x32xf32> to vector<8x4x8xf32>
    %45 = tpu.transpose %44, [1, 0, 2] : vector<8x4x8xf32> -> vector<4x8x8xf32>
    "tpu.trace_start"() <{level = 10 : i32, message = "hqd,hkd->hqk"}> : () -> ()
    %cst_19 = arith.constant dense<0.000000e+00> : vector<4x8x8xf32>
    %46 = tpu.matmul %41, %43, %cst_19 {dimension_numbers = #tpu.dot_dimension_numbers<[2], [2], [1], [1], [0, 0, 0, 1, 1, 1], [0], [0]>} : vector<4x8x8xf32>, vector<4x8x8xf32>, vector<4x8x8xf32> -> vector<4x8x8xf32>
    "tpu.trace_stop"() : () -> ()
    %c0_20 = arith.constant 0 : index
    %c0_21 = arith.constant 0 : index
    %c0_22 = arith.constant 0 : index
    %47 = vector.load %arg3[%c0_20, %c0_21, %c0_22] : memref<1x1x8xf32, #tpu.memory_space<vmem>>, vector<1x1x8xf32>
    %48 = vector.shape_cast %47 : vector<1x1x8xf32> to vector<1x8xf32>
    %cst_23 = arith.constant 0.000000e+00 : f32
    %49 = vector.broadcast %cst_23 : f32 to vector<1x8xf32>
    %50 = arith.cmpf ogt, %48, %49 : vector<1x8xf32>
    %51 = vector.shape_cast %50 : vector<1x8xi1> to vector<1x1x8xi1>
    %cst_24 = arith.constant -1.000000e+09 : f32
    %52 = vector.shape_cast %51 : vector<1x1x8xi1> to vector<1x1x8xi1>
    %53 = vector.broadcast %52 : vector<1x1x8xi1> to vector<4x8x8xi1>
    %54 = vector.broadcast %cst_24 : f32 to vector<4x8x8xf32>
    %55 = arith.select %53, %46, %54 : vector<4x8x8xi1>, vector<4x8x8xf32>
    %cst_25 = arith.constant dense<0xFF800000> : vector<4x8xf32>
    %56 = vector.multi_reduction <maximumf>, %55, %cst_25 [2] : vector<4x8x8xf32> to vector<4x8xf32>
    %57 = vector.shape_cast %56 : vector<4x8xf32> to vector<4x8x1xf32>
    %58 = vector.broadcast %57 : vector<4x8x1xf32> to vector<4x8x8xf32>
    %59 = arith.subf %55, %58 : vector<4x8x8xf32>
    %60 = math.exp %59 : vector<4x8x8xf32>
    %cst_26 = arith.constant dense<0.000000e+00> : vector<4x8xf32>
    %61 = vector.multi_reduction <add>, %60, %cst_26 [2] : vector<4x8x8xf32> to vector<4x8xf32>
    %62 = vector.shape_cast %61 : vector<4x8xf32> to vector<4x8x1xf32>
    %63 = tpu.reciprocal %62 {approx = true} : vector<4x8x1xf32> -> vector<4x8x1xf32>
    %64 = vector.broadcast %63 : vector<4x8x1xf32> to vector<4x8x8xf32>
    %65 = arith.mulf %60, %64 : vector<4x8x8xf32>
    "tpu.trace_start"() <{level = 10 : i32, message = "hqk,hkd->hqd"}> : () -> ()
    %cst_27 = arith.constant dense<0.000000e+00> : vector<4x8x8xf32>
    %66 = tpu.matmul %65, %45, %cst_27 {dimension_numbers = #tpu.dot_dimension_numbers<[2], [1], [1], [2], [0, 0, 0, 1, 1, 2], [0], [0]>} : vector<4x8x8xf32>, vector<4x8x8xf32>, vector<4x8x8xf32> -> vector<4x8x8xf32>
    "tpu.trace_stop"() : () -> ()
    %67 = tpu.transpose %66, [1, 0, 2] : vector<4x8x8xf32> -> vector<8x4x8xf32>
    %68 = vector.shape_cast %67 : vector<8x4x8xf32> to vector<8x32xf32>
    %c0_28 = arith.constant 0 : index
    %c0_29 = arith.constant 0 : index
    %c0_30 = arith.constant 0 : index
    %69 = vector.load %arg8[%c0_28, %c0_29, %c0_30] : memref<1x32x32xf32, #tpu.memory_space<vmem>>, vector<1x32x32xf32>
    %70 = vector.shape_cast %69 : vector<1x32x32xf32> to vector<32x32xf32>
    %cst_31 = arith.constant dense<0.000000e+00> : vector<8x32xf32>
    %71 = tpu.matmul %68, %70, %cst_31 {dimension_numbers = #tpu.dot_dimension_numbers<[1], [0], [0], [1], [0, 0, 1, 1], [], []>} : vector<8x32xf32>, vector<32x32xf32>, vector<8x32xf32> -> vector<8x32xf32>
    %c0_32 = arith.constant 0 : index
    %c0_33 = arith.constant 0 : index
    %c0_34 = arith.constant 0 : index
    %72 = vector.load %arg9[%c0_32, %c0_33, %c0_34] : memref<1x1x32xf32, #tpu.memory_space<vmem>>, vector<1x1x32xf32>
    %73 = vector.shape_cast %72 : vector<1x1x32xf32> to vector<1x32xf32>
    %74 = vector.broadcast %73 : vector<1x32xf32> to vector<8x32xf32>
    %75 = arith.addf %71, %74 : vector<8x32xf32>
    %76 = arith.addf %3, %75 : vector<8x32xf32>
    %c0_35 = arith.constant 0 : index
    %c0_36 = arith.constant 0 : index
    %c0_37 = arith.constant 0 : index
    %77 = vector.load %arg10[%c0_35, %c0_36, %c0_37] : memref<1x1x32xf32, #tpu.memory_space<vmem>>, vector<1x1x32xf32>
    %78 = vector.shape_cast %77 : vector<1x1x32xf32> to vector<1x32xf32>
    %c0_38 = arith.constant 0 : index
    %c0_39 = arith.constant 0 : index
    %c0_40 = arith.constant 0 : index
    %79 = vector.load %arg11[%c0_38, %c0_39, %c0_40] : memref<1x1x32xf32, #tpu.memory_space<vmem>>, vector<1x1x32xf32>
    %80 = vector.shape_cast %79 : vector<1x1x32xf32> to vector<1x32xf32>
    %cst_41 = arith.constant dense<0.000000e+00> : vector<8xf32>
    %81 = vector.multi_reduction <add>, %76, %cst_41 [1] : vector<8x32xf32> to vector<8xf32>
    %82 = vector.shape_cast %81 : vector<8xf32> to vector<8x1xf32>
    %cst_42 = arith.constant 3.200000e+01 : f32
    %83 = vector.broadcast %cst_42 : f32 to vector<8x1xf32>
    %84 = arith.divf %82, %83 : vector<8x1xf32>
    %85 = vector.broadcast %84 : vector<8x1xf32> to vector<8x32xf32>
    %86 = arith.subf %76, %85 : vector<8x32xf32>
    %87 = arith.mulf %86, %86 : vector<8x32xf32>
    %cst_43 = arith.constant dense<0.000000e+00> : vector<8xf32>
    %88 = vector.multi_reduction <add>, %87, %cst_43 [1] : vector<8x32xf32> to vector<8xf32>
    %89 = vector.shape_cast %88 : vector<8xf32> to vector<8x1xf32>
    %cst_44 = arith.constant 3.200000e+01 : f32
    %90 = vector.broadcast %cst_44 : f32 to vector<8x1xf32>
    %91 = arith.divf %89, %90 : vector<8x1xf32>
    %92 = vector.broadcast %84 : vector<8x1xf32> to vector<8x32xf32>
    %93 = arith.subf %76, %92 : vector<8x32xf32>
    %cst_45 = arith.constant 9.99999974E-6 : f32
    %94 = vector.broadcast %cst_45 : f32 to vector<8x1xf32>
    %95 = arith.addf %91, %94 : vector<8x1xf32>
    %96 = math.rsqrt %95 : vector<8x1xf32>
    %97 = vector.broadcast %96 : vector<8x1xf32> to vector<8x32xf32>
    %98 = arith.mulf %93, %97 : vector<8x32xf32>
    %99 = vector.broadcast %78 : vector<1x32xf32> to vector<8x32xf32>
    %100 = arith.mulf %98, %99 : vector<8x32xf32>
    %101 = vector.broadcast %80 : vector<1x32xf32> to vector<8x32xf32>
    %102 = arith.addf %100, %101 : vector<8x32xf32>
    %c0_46 = arith.constant 0 : index
    %c0_47 = arith.constant 0 : index
    %c0_48 = arith.constant 0 : index
    %103 = vector.load %arg12[%c0_46, %c0_47, %c0_48] : memref<1x32x64xf32, #tpu.memory_space<vmem>>, vector<1x32x64xf32>
    %104 = vector.shape_cast %103 : vector<1x32x64xf32> to vector<32x64xf32>
    %cst_49 = arith.constant dense<0.000000e+00> : vector<8x64xf32>
    %105 = tpu.matmul %102, %104, %cst_49 {dimension_numbers = #tpu.dot_dimension_numbers<[1], [0], [0], [1], [0, 0, 1, 1], [], []>} : vector<8x32xf32>, vector<32x64xf32>, vector<8x64xf32> -> vector<8x64xf32>
    %c0_50 = arith.constant 0 : index
    %c0_51 = arith.constant 0 : index
    %c0_52 = arith.constant 0 : index
    %106 = vector.load %arg13[%c0_50, %c0_51, %c0_52] : memref<1x1x64xf32, #tpu.memory_space<vmem>>, vector<1x1x64xf32>
    %107 = vector.shape_cast %106 : vector<1x1x64xf32> to vector<1x64xf32>
    %108 = vector.broadcast %107 : vector<1x64xf32> to vector<8x64xf32>
    %109 = arith.addf %105, %108 : vector<8x64xf32>
    %cst_53 = arith.constant 0.000000e+00 : f32
    %110 = vector.broadcast %cst_53 : f32 to vector<8x64xf32>
    %111 = arith.maximumf %109, %110 : vector<8x64xf32>
    %c0_54 = arith.constant 0 : index
    %c0_55 = arith.constant 0 : index
    %c0_56 = arith.constant 0 : index
    %112 = vector.load %arg14[%c0_54, %c0_55, %c0_56] : memref<1x64x32xf32, #tpu.memory_space<vmem>>, vector<1x64x32xf32>
    %113 = vector.shape_cast %112 : vector<1x64x32xf32> to vector<64x32xf32>
    %cst_57 = arith.constant dense<0.000000e+00> : vector<8x32xf32>
    %114 = tpu.matmul %111, %113, %cst_57 {dimension_numbers = #tpu.dot_dimension_numbers<[1], [0], [0], [1], [0, 0, 1, 1], [], []>} : vector<8x64xf32>, vector<64x32xf32>, vector<8x32xf32> -> vector<8x32xf32>
    %c0_58 = arith.constant 0 : index
    %c0_59 = arith.constant 0 : index
    %c0_60 = arith.constant 0 : index
    %115 = vector.load %arg15[%c0_58, %c0_59, %c0_60] : memref<1x1x32xf32, #tpu.memory_space<vmem>>, vector<1x1x32xf32>
    %116 = vector.shape_cast %115 : vector<1x1x32xf32> to vector<1x32xf32>
    %117 = vector.broadcast %116 : vector<1x32xf32> to vector<8x32xf32>
    %118 = arith.addf %114, %117 : vector<8x32xf32>
    %119 = arith.addf %76, %118 : vector<8x32xf32>
    %c0_61 = arith.constant 0 : index
    %c0_62 = arith.constant 0 : index
    %120 = vector.load %arg19[%c0_61, %c0_62] : memref<8x32xf32, #tpu.memory_space<vmem>>, vector<8x32xf32>
    tpu.vector_store %arg19[%c0_61, %c0_62], %119 {strides = array<i32>} : memref<8x32xf32, #tpu.memory_space<vmem>>, vector<8x32xf32>,
    %c1_i32 = arith.constant 1 : i32
    %121 = arith.cmpi eq, %arg1, %c1_i32 : i32
    %122 = arith.extui %121 : i1 to i32
    %c0_i32_63 = arith.constant 0 : i32
    %123 = arith.cmpi ne, %122, %c0_i32_63 : i32
    scf.if %123 {
      %c0_64 = arith.constant 0 : index
      %c0_65 = arith.constant 0 : index
      %124 = vector.load %arg16[%c0_64, %c0_65] : memref<1x32xf32, #tpu.memory_space<vmem>>, vector<1x32xf32>
      %c0_66 = arith.constant 0 : index
      %c0_67 = arith.constant 0 : index
      %125 = vector.load %arg17[%c0_66, %c0_67] : memref<1x32xf32, #tpu.memory_space<vmem>>, vector<1x32xf32>
      %cst_68 = arith.constant dense<0.000000e+00> : vector<8xf32>
      %126 = vector.multi_reduction <add>, %119, %cst_68 [1] : vector<8x32xf32> to vector<8xf32>
      %127 = vector.shape_cast %126 : vector<8xf32> to vector<8x1xf32>
      %cst_69 = arith.constant 3.200000e+01 : f32
      %128 = vector.broadcast %cst_69 : f32 to vector<8x1xf32>
      %129 = arith.divf %127, %128 : vector<8x1xf32>
      %130 = vector.broadcast %129 : vector<8x1xf32> to vector<8x32xf32>
      %131 = arith.subf %119, %130 : vector<8x32xf32>
      %132 = arith.mulf %131, %131 : vector<8x32xf32>
      %cst_70 = arith.constant dense<0.000000e+00> : vector<8xf32>
      %133 = vector.multi_reduction <add>, %132, %cst_70 [1] : vector<8x32xf32> to vector<8xf32>
      %134 = vector.shape_cast %133 : vector<8xf32> to vector<8x1xf32>
      %cst_71 = arith.constant 3.200000e+01 : f32
      %135 = vector.broadcast %cst_71 : f32 to vector<8x1xf32>
      %136 = arith.divf %134, %135 : vector<8x1xf32>
      %137 = vector.broadcast %129 : vector<8x1xf32> to vector<8x32xf32>
      %138 = arith.subf %119, %137 : vector<8x32xf32>
      %cst_72 = arith.constant 9.99999974E-6 : f32
      %139 = vector.broadcast %cst_72 : f32 to vector<8x1xf32>
      %140 = arith.addf %136, %139 : vector<8x1xf32>
      %141 = math.rsqrt %140 : vector<8x1xf32>
      %142 = vector.broadcast %141 : vector<8x1xf32> to vector<8x32xf32>
      %143 = arith.mulf %138, %142 : vector<8x32xf32>
      %144 = vector.broadcast %124 : vector<1x32xf32> to vector<8x32xf32>
      %145 = arith.mulf %143, %144 : vector<8x32xf32>
      %146 = vector.broadcast %125 : vector<1x32xf32> to vector<8x32xf32>
      %147 = arith.addf %145, %146 : vector<8x32xf32>
      %c0_73 = arith.constant 0 : index
      %c0_74 = arith.constant 0 : index
      %c0_75 = arith.constant 0 : index
      %148 = vector.load %arg18[%c0_73, %c0_74, %c0_75] : memref<1x8x32xf32, #tpu.memory_space<vmem>>, vector<1x8x32xf32>
      %149 = vector.shape_cast %148 : vector<1x8x32xf32> to vector<8x32xf32>
      %150 = vector.shape_cast %147 : vector<8x32xf32> to vector<1x8x32xf32>
      tpu.vector_store %arg18[%c0_73, %c0_74, %c0_75], %150 {strides = array<i32>} : memref<1x8x32xf32, #tpu.memory_space<vmem>>, vector<1x8x32xf32>,
    } else {
    }
    return
  }
  func.func @transform_0(%arg0: i32, %arg1: i32) -> (i32, i32, i32) {
    %c0_i32 = arith.constant 0 : i32
    %c0_i32_0 = arith.constant 0 : i32
    %c0_i32_1 = arith.constant 0 : i32
    return %arg0, %c0_i32, %c0_i32_0 : i32, i32, i32
  }
  func.func @transform_1(%arg0: i32, %arg1: i32) -> (i32, i32, i32) {
    %c0_i32 = arith.constant 0 : i32
    %c0_i32_0 = arith.constant 0 : i32
    %c0_i32_1 = arith.constant 0 : i32
    return %arg0, %c0_i32, %c0_i32_0 : i32, i32, i32
  }
  func.func @transform_2(%arg0: i32, %arg1: i32) -> (i32, i32, i32) {
    %c0_i32 = arith.constant 0 : i32
    %c0_i32_0 = arith.constant 0 : i32
    %c0_i32_1 = arith.constant 0 : i32
    return %arg1, %c0_i32, %c0_i32_0 : i32, i32, i32
  }
  func.func @transform_3(%arg0: i32, %arg1: i32) -> (i32, i32, i32) {
    %c0_i32 = arith.constant 0 : i32
    %c0_i32_0 = arith.constant 0 : i32
    %c0_i32_1 = arith.constant 0 : i32
    return %arg1, %c0_i32, %c0_i32_0 : i32, i32, i32
  }
  func.func @transform_4(%arg0: i32, %arg1: i32) -> (i32, i32, i32) {
    %c0_i32 = arith.constant 0 : i32
    %c0_i32_0 = arith.constant 0 : i32
    %c0_i32_1 = arith.constant 0 : i32
    return %arg1, %c0_i32, %c0_i32_0 : i32, i32, i32
  }
  func.func @transform_5(%arg0: i32, %arg1: i32) -> (i32, i32, i32) {
    %c0_i32 = arith.constant 0 : i32
    %c0_i32_0 = arith.constant 0 : i32
    %c0_i32_1 = arith.constant 0 : i32
    return %arg1, %c0_i32, %c0_i32_0 : i32, i32, i32
  }
  func.func @transform_6(%arg0: i32, %arg1: i32) -> (i32, i32, i32) {
    %c0_i32 = arith.constant 0 : i32
    %c0_i32_0 = arith.constant 0 : i32
    %c0_i32_1 = arith.constant 0 : i32
    return %arg1, %c0_i32, %c0_i32_0 : i32, i32, i32
  }
  func.func @transform_7(%arg0: i32, %arg1: i32) -> (i32, i32, i32) {
    %c0_i32 = arith.constant 0 : i32
    %c0_i32_0 = arith.constant 0 : i32
    %c0_i32_1 = arith.constant 0 : i32
    return %arg1, %c0_i32, %c0_i32_0 : i32, i32, i32
  }
  func.func @transform_8(%arg0: i32, %arg1: i32) -> (i32, i32, i32) {
    %c0_i32 = arith.constant 0 : i32
    %c0_i32_0 = arith.constant 0 : i32
    %c0_i32_1 = arith.constant 0 : i32
    return %arg1, %c0_i32, %c0_i32_0 : i32, i32, i32
  }
  func.func @transform_9(%arg0: i32, %arg1: i32) -> (i32, i32, i32) {
    %c0_i32 = arith.constant 0 : i32
    %c0_i32_0 = arith.constant 0 : i32
    %c0_i32_1 = arith.constant 0 : i32
    return %arg1, %c0_i32, %c0_i32_0 : i32, i32, i32
  }
  func.func @transform_10(%arg0: i32, %arg1: i32) -> (i32, i32, i32) {
    %c0_i32 = arith.constant 0 : i32
    %c0_i32_0 = arith.constant 0 : i32
    %c0_i32_1 = arith.constant 0 : i32
    return %arg1, %c0_i32, %c0_i32_0 : i32, i32, i32
  }
  func.func @transform_11(%arg0: i32, %arg1: i32) -> (i32, i32, i32) {
    %c0_i32 = arith.constant 0 : i32
    %c0_i32_0 = arith.constant 0 : i32
    %c0_i32_1 = arith.constant 0 : i32
    return %arg1, %c0_i32, %c0_i32_0 : i32, i32, i32
  }
  func.func @transform_12(%arg0: i32, %arg1: i32) -> (i32, i32, i32) {
    %c0_i32 = arith.constant 0 : i32
    %c0_i32_0 = arith.constant 0 : i32
    %c0_i32_1 = arith.constant 0 : i32
    return %arg1, %c0_i32, %c0_i32_0 : i32, i32, i32
  }
  func.func @transform_13(%arg0: i32, %arg1: i32) -> (i32, i32, i32) {
    %c0_i32 = arith.constant 0 : i32
    %c0_i32_0 = arith.constant 0 : i32
    %c0_i32_1 = arith.constant 0 : i32
    return %arg1, %c0_i32, %c0_i32_0 : i32, i32, i32
  }
  func.func @transform_14(%arg0: i32, %arg1: i32) -> (i32, i32) {
    %c0_i32 = arith.constant 0 : i32
    %c0_i32_0 = arith.constant 0 : i32
    %c0_i32_1 = arith.constant 0 : i32
    return %c0_i32, %c0_i32_0 : i32, i32
  }
  func.func @transform_15(%arg0: i32, %arg1: i32) -> (i32, i32) {
    %c0_i32 = arith.constant 0 : i32
    %c0_i32_0 = arith.constant 0 : i32
    %c0_i32_1 = arith.constant 0 : i32
    return %c0_i32, %c0_i32_0 : i32, i32
  }
  func.func @transform_16(%arg0: i32, %arg1: i32) -> (i32, i32, i32) {
    %c0_i32 = arith.constant 0 : i32
    %c0_i32_0 = arith.constant 0 : i32
    %c0_i32_1 = arith.constant 0 : i32
    return %arg0, %c0_i32, %c0_i32_0 : i32, i32, i32
  }
}

</mosaic_0001>

<llo_original>
// kernel: tpu_custom_call.1
$region0: #{tpu_custom_call.1}
  #allocation0 [shape = 'u32[]', space=smem, size = 0x4, offset = 0x4, fixed_abs, tag = 'smem constant byte address 0x4 - core index']
  #allocation1 [shape = 'u32[144,128]{1,0:T(1,128)}', space=vmem, size = 0x12000, scoped, tag = 'internal scratch']
  #allocation2 [shape = 'f32[8,32]{1,0:T(8,128)}', space=vmem, size = 0x1000, scoped, tag = 'scratch operand']
  %s0 = inlined_call_operand.hbm [shape: f32[2,8,32], index: 0, kind: input, shape index: {}]
  %s1 = inlined_call_operand.vmem [shape: f32[2,1,8], index: 1, kind: input, shape index: {}]
  %s2 = inlined_call_operand.vmem [shape: f32[2,1,32], index: 2, kind: input, shape index: {}]
  %s3 = inlined_call_operand.vmem [shape: f32[2,1,32], index: 3, kind: input, shape index: {}]
  %s4 = inlined_call_operand.vmem [shape: f32[2,32,96], index: 4, kind: input, shape index: {}]
  %s5 = inlined_call_operand.vmem [shape: f32[2,1,96], index: 5, kind: input, shape index: {}]
  %s6 = inlined_call_operand.vmem [shape: f32[2,32,32], index: 6, kind: input, shape index: {}]
  %s7 = inlined_call_operand.vmem [shape: f32[2,1,32], index: 7, kind: input, shape index: {}]
  %s8 = inlined_call_operand.vmem [shape: f32[2,1,32], index: 8, kind: input, shape index: {}]
  %s9 = inlined_call_operand.vmem [shape: f32[2,1,32], index: 9, kind: input, shape index: {}]
  %s10 = inlined_call_operand.vmem [shape: f32[2,32,64], index: 10, kind: input, shape index: {}]
  %s11 = inlined_call_operand.vmem [shape: f32[2,1,64], index: 11, kind: input, shape index: {}]
  %s12 = inlined_call_operand.vmem [shape: f32[2,64,32], index: 12, kind: input, shape index: {}]
  %s13 = inlined_call_operand.vmem [shape: f32[2,1,32], index: 13, kind: input, shape index: {}]
  %s14 = inlined_call_operand.vmem [shape: f32[1,32], index: 14, kind: input, shape index: {}]
  %s15 = inlined_call_operand.vmem [shape: f32[1,32], index: 15, kind: input, shape index: {}]
  %s16 = inlined_call_operand.hbm [shape: f32[2,8,32], index: 16, kind: output, shape index: {}]
  %s17 = sld [smem:[#allocation0]]
  $region109: #{tpu_custom_call.1} parent=0
    _
  %s19 = ssub.s32 1, %s17
  %s20 = scalar_select 0, %s19, %s17
  $region1: #{tpu_custom_call.1} parent=0
    #allocation3 [shape = 'u8[8192]{0}', space=vmem, size = 0x2000, scoped, tag = 'input window, operand 0']
    #allocation4 [shape = 's32[2]{0}', space=sflag, size = 0x8, scoped, tag = 'scoped memory for tpu_custom_call.1']
    #allocation5 [shape = 's32[2]{0}', space=sflag, size = 0x8, scoped, tag = 'scoped memory for tpu_custom_call.1']
    #allocation6 [shape = 'u8[8192]{0}', space=vmem, size = 0x2000, scoped, tag = 'output window, operand 0']
    %21 = vsyncpa [#allocation4], 0
    %s22 = scalar_lea.sflag [#allocation4], 1
    %23 = vsyncpa %s22, 0
    %24 = vsyncpa [#allocation5], 0
    %s25 = scalar_lea.sflag [#allocation5], 1
    %26 = vsyncpa %s25, 0
    loop: start=0, step=1, limit=6
    $region2: #{tpu_custom_call.1} parent=1 // loop_pre_header
      _
    $region3: #{tpu_custom_call.1} parent=1 // loop_header
      %s28 = sphi 0, %s32
      %p29 = scmp.ge.s32.totalorder %s28, 6
      %s35 = sphi 0, %s47
      %s36 = sphi 0, %s43
      %s37 = sphi 0, %s35
      %s38 = sphi 0, %s36
      %s39 = sphi 0, %s37
      %s40 = sphi 0, %s38
      %s50 = sphi 0, %s52
      %s53 = sphi 0, %s50
      %s54 = sphi 0, %s53
      %s70 = sphi 0, %s54
      %s76 = sphi 0, %s78
      %s79 = sphi 0, %s76
      %s80 = sphi 0, %s79
      %s96 = sphi 0, %s80
      %s102 = sphi 0, %s104
      %s105 = sphi 0, %s102
      %s106 = sphi 0, %s105
      %s122 = sphi 0, %s106
      %s128 = sphi 0, %s130
      %s131 = sphi 0, %s128
      %s132 = sphi 0, %s131
      %s148 = sphi 0, %s132
      %s154 = sphi 0, %s156
      %s157 = sphi 0, %s154
      %s158 = sphi 0, %s157
      %s174 = sphi 0, %s158
      %s180 = sphi 0, %s182
      %s183 = sphi 0, %s180
      %s184 = sphi 0, %s183
      %s200 = sphi 0, %s184
      %s206 = sphi 0, %s208
      %s209 = sphi 0, %s206
      %s210 = sphi 0, %s209
      %s226 = sphi 0, %s210
      %s232 = sphi 0, %s234
      %s235 = sphi 0, %s232
      %s236 = sphi 0, %s235
      %s252 = sphi 0, %s236
      %s258 = sphi 0, %s260
      %s261 = sphi 0, %s258
      %s262 = sphi 0, %s261
      %s278 = sphi 0, %s262
      %s284 = sphi 0, %s286
      %s287 = sphi 0, %s284
      %s288 = sphi 0, %s287
      %s304 = sphi 0, %s288
      %s310 = sphi 0, %s312
      %s313 = sphi 0, %s310
      %s314 = sphi 0, %s313
      %s330 = sphi 0, %s314
      %s336 = sphi 0, %s338
      %s339 = sphi 0, %s336
      %s340 = sphi 0, %s339
      %s356 = sphi 0, %s340
      %s362 = sphi 0, %s364
      %s365 = sphi 0, %s362
      %s366 = sphi 0, %s365
      %s382 = sphi 0, %s366
      %s388 = sphi 0, %s390
      %s391 = sphi 0, %s388
      %s392 = sphi 0, %s391
      %s408 = sphi 0, %s392
      %s412 = sphi 0, %s412
      %s414 = sphi 0, %s412
      %s415 = sphi 0, %s414
      %s429 = sphi 0, %s415
      %s433 = sphi 0, %s433
      %s435 = sphi 0, %s433
      %s436 = sphi 0, %s435
      %s450 = sphi 0, %s436
      %s456 = sphi 0, %s458
      %s459 = sphi 0, %s456
      %s460 = sphi 0, %s459
      %s476 = sphi 0, %s460
    $region4: #{tpu_custom_call.1} parent=1 // loop_header_branch
      %31 = sbr.rel (%p29) target = $region8
    $region5: #{tpu_custom_call.1} parent=1 // loop_body
      %s33 = ssub.s32 %s28, 1
      %s34 = ssub.s32 %s28, 2
      %s41 = sadd.s32 1, %s36
      %p42 = scmp.ge.s32.totalorder %s41, 2
      %s43 = scalar_select %p42, 0, %s41
      %s44 = sadd.s32 1, %s35
      %s45 = scalar_select %p42, %s44, %s35
      %p46 = scmp.ge.s32.totalorder %s45, 2
      %s47 = scalar_select %p46, 0, %s45
      %s48 = ssub.s32 %s35, %s47
      %p49 = scmp.eq.s32.totalorder %s48, 0
      %s51 = sadd.s32 %s50, 1
      %s52 = scalar_select %p49, %s50, %s51
      %p55 = pneg %p49
      %p56 = scmp.eq.s32.totalorder %s28, 3
      %p57 = por %p55, %p56
      %p58 = scmp.ne.s32.totalorder %s50, %s53
      %p59 = scmp.eq.s32.totalorder %s28, 0
      %p60 = por %p58, %p59
      %p61 = scmp.ne.s32.totalorder %s50, %s53
      %p62 = scmp.eq.s32.totalorder %s33, 3
      %p63 = por %p61, %p62
      %p64 = scmp.ne.s32.totalorder %s53, %s54
      %p65 = scmp.eq.s32.totalorder %s33, 0
      %p66 = por %p64, %p65
      %p67 = scmp.ne.s32.totalorder %s53, %s54
      %p68 = scmp.eq.s32.totalorder %s34, 3
      %p69 = por %p67, %p68
      %p71 = scmp.ne.s32.totalorder %s54, %s70
      %p72 = scmp.eq.s32.totalorder %s34, 0
      %p73 = por %p71, %p72
      %s74 = ssub.s32 %s35, %s47
      %p75 = scmp.eq.s32.totalorder %s74, 0
      %s77 = sadd.s32 %s76, 1
      %s78 = scalar_select %p75, %s76, %s77
      %p81 = pneg %p75
      %p82 = scmp.eq.s32.totalorder %s28, 3
      %p83 = por %p81, %p82
      %p84 = scmp.ne.s32.totalorder %s76, %s79
      %p85 = scmp.eq.s32.totalorder %s28, 0
      %p86 = por %p84, %p85
      %p87 = scmp.ne.s32.totalorder %s76, %s79
      %p88 = scmp.eq.s32.totalorder %s33, 3
      %p89 = por %p87, %p88
      %p90 = scmp.ne.s32.totalorder %s79, %s80
      %p91 = scmp.eq.s32.totalorder %s33, 0
      %p92 = por %p90, %p91
      %p93 = scmp.ne.s32.totalorder %s79, %s80
      %p94 = scmp.eq.s32.totalorder %s34, 3
      %p95 = por %p93, %p94
      %p97 = scmp.ne.s32.totalorder %s80, %s96
      %p98 = scmp.eq.s32.totalorder %s34, 0
      %p99 = por %p97, %p98
      %s100 = ssub.s32 %s36, %s43
      %p101 = scmp.eq.s32.totalorder %s100, 0
      %s103 = sadd.s32 %s102, 1
      %s104 = scalar_select %p101, %s102, %s103
      %p107 = pneg %p101
      %p108 = scmp.eq.s32.totalorder %s28, 3
      %p109 = por %p107, %p108
      %p110 = scmp.ne.s32.totalorder %s102, %s105
      %p111 = scmp.eq.s32.totalorder %s28, 0
      %p112 = por %p110, %p111
      %p113 = scmp.ne.s32.totalorder %s102, %s105
      %p114 = scmp.eq.s32.totalorder %s33, 3
      %p115 = por %p113, %p114
      %p116 = scmp.ne.s32.totalorder %s105, %s106
      %p117 = scmp.eq.s32.totalorder %s33, 0
      %p118 = por %p116, %p117
      %p119 = scmp.ne.s32.totalorder %s105, %s106
      %p120 = scmp.eq.s32.totalorder %s34, 3
      %p121 = por %p119, %p120
      %p123 = scmp.ne.s32.totalorder %s106, %s122
      %p124 = scmp.eq.s32.totalorder %s34, 0
      %p125 = por %p123, %p124
      %s126 = ssub.s32 %s36, %s43
      %p127 = scmp.eq.s32.totalorder %s126, 0
      %s129 = sadd.s32 %s128, 1
      %s130 = scalar_select %p127, %s128, %s129
      %p133 = pneg %p127
      %p134 = scmp.eq.s32.totalorder %s28, 3
      %p135 = por %p133, %p134
      %p136 = scmp.ne.s32.totalorder %s128, %s131
      %p137 = scmp.eq.s32.totalorder %s28, 0
      %p138 = por %p136, %p137
      %p139 = scmp.ne.s32.totalorder %s128, %s131
      %p140 = scmp.eq.s32.totalorder %s33, 3
      %p141 = por %p139, %p140
      %p142 = scmp.ne.s32.totalorder %s131, %s132
      %p143 = scmp.eq.s32.totalorder %s33, 0
      %p144 = por %p142, %p143
      %p145 = scmp.ne.s32.totalorder %s131, %s132
      %p146 = scmp.eq.s32.totalorder %s34, 3
      %p147 = por %p145, %p146
      %p149 = scmp.ne.s32.totalorder %s132, %s148
      %p150 = scmp.eq.s32.totalorder %s34, 0
      %p151 = por %p149, %p150
      %s152 = ssub.s32 %s36, %s43
      %p153 = scmp.eq.s32.totalorder %s152, 0
      %s155 = sadd.s32 %s154, 1
      %s156 = scalar_select %p153, %s154, %s155
      %p159 = pneg %p153
      %p160 = scmp.eq.s32.totalorder %s28, 3
      %p161 = por %p159, %p160
      %p162 = scmp.ne.s32.totalorder %s154, %s157
      %p163 = scmp.eq.s32.totalorder %s28, 0
      %p164 = por %p162, %p163
      %p165 = scmp.ne.s32.totalorder %s154, %s157
      %p166 = scmp.eq.s32.totalorder %s33, 3
      %p167 = por %p165, %p166
      %p168 = scmp.ne.s32.totalorder %s157, %s158
      %p169 = scmp.eq.s32.totalorder %s33, 0
      %p170 = por %p168, %p169
      %p171 = scmp.ne.s32.totalorder %s157, %s158
      %p172 = scmp.eq.s32.totalorder %s34, 3
      %p173 = por %p171, %p172
      %p175 = scmp.ne.s32.totalorder %s158, %s174
      %p176 = scmp.eq.s32.totalorder %s34, 0
      %p177 = por %p175, %p176
      %s178 = ssub.s32 %s36, %s43
      %p179 = scmp.eq.s32.totalorder %s178, 0
      %s181 = sadd.s32 %s180, 1
      %s182 = scalar_select %p179, %s180, %s181
      %p185 = pneg %p179
      %p186 = scmp.eq.s32.totalorder %s28, 3
      %p187 = por %p185, %p186
      %p188 = scmp.ne.s32.totalorder %s180, %s183
      %p189 = scmp.eq.s32.totalorder %s28, 0
      %p190 = por %p188, %p189
      %p191 = scmp.ne.s32.totalorder %s180, %s183
      %p192 = scmp.eq.s32.totalorder %s33, 3
      %p193 = por %p191, %p192
      %p194 = scmp.ne.s32.totalorder %s183, %s184
      %p195 = scmp.eq.s32.totalorder %s33, 0
      %p196 = por %p194, %p195
      %p197 = scmp.ne.s32.totalorder %s183, %s184
      %p198 = scmp.eq.s32.totalorder %s34, 3
      %p199 = por %p197, %p198
      %p201 = scmp.ne.s32.totalorder %s184, %s200
      %p202 = scmp.eq.s32.totalorder %s34, 0
      %p203 = por %p201, %p202
      %s204 = ssub.s32 %s36, %s43
      %p205 = scmp.eq.s32.totalorder %s204, 0
      %s207 = sadd.s32 %s206, 1
      %s208 = scalar_select %p205, %s206, %s207
      %p211 = pneg %p205
      %p212 = scmp.eq.s32.totalorder %s28, 3
      %p213 = por %p211, %p212
      %p214 = scmp.ne.s32.totalorder %s206, %s209
      %p215 = scmp.eq.s32.totalorder %s28, 0
      %p216 = por %p214, %p215
      %p217 = scmp.ne.s32.totalorder %s206, %s209
      %p218 = scmp.eq.s32.totalorder %s33, 3
      %p219 = por %p217, %p218
      %p220 = scmp.ne.s32.totalorder %s209, %s210
      %p221 = scmp.eq.s32.totalorder %s33, 0
      %p222 = por %p220, %p221
      %p223 = scmp.ne.s32.totalorder %s209, %s210
      %p224 = scmp.eq.s32.totalorder %s34, 3
      %p225 = por %p223, %p224
      %p227 = scmp.ne.s32.totalorder %s210, %s226
      %p228 = scmp.eq.s32.totalorder %s34, 0
      %p229 = por %p227, %p228
      %s230 = ssub.s32 %s36, %s43
      %p231 = scmp.eq.s32.totalorder %s230, 0
      %s233 = sadd.s32 %s232, 1
      %s234 = scalar_select %p231, %s232, %s233
      %p237 = pneg %p231
      %p238 = scmp.eq.s32.totalorder %s28, 3
      %p239 = por %p237, %p238
      %p240 = scmp.ne.s32.totalorder %s232, %s235
      %p241 = scmp.eq.s32.totalorder %s28, 0
      %p242 = por %p240, %p241
      %p243 = scmp.ne.s32.totalorder %s232, %s235
      %p244 = scmp.eq.s32.totalorder %s33, 3
      %p245 = por %p243, %p244
      %p246 = scmp.ne.s32.totalorder %s235, %s236
      %p247 = scmp.eq.s32.totalorder %s33, 0
      %p248 = por %p246, %p247
      %p249 = scmp.ne.s32.totalorder %s235, %s236
      %p250 = scmp.eq.s32.totalorder %s34, 3
      %p251 = por %p249, %p250
      %p253 = scmp.ne.s32.totalorder %s236, %s252
      %p254 = scmp.eq.s32.totalorder %s34, 0
      %p255 = por %p253, %p254
      %s256 = ssub.s32 %s36, %s43
      %p257 = scmp.eq.s32.totalorder %s256, 0
      %s259 = sadd.s32 %s258, 1
      %s260 = scalar_select %p257, %s258, %s259
      %p263 = pneg %p257
      %p264 = scmp.eq.s32.totalorder %s28, 3
      %p265 = por %p263, %p264
      %p266 = scmp.ne.s32.totalorder %s258, %s261
      %p267 = scmp.eq.s32.totalorder %s28, 0
      %p268 = por %p266, %p267
      %p269 = scmp.ne.s32.totalorder %s258, %s261
      %p270 = scmp.eq.s32.totalorder %s33, 3
      %p271 = por %p269, %p270
      %p272 = scmp.ne.s32.totalorder %s261, %s262
      %p273 = scmp.eq.s32.totalorder %s33, 0
      %p274 = por %p272, %p273
      %p275 = scmp.ne.s32.totalorder %s261, %s262
      %p276 = scmp.eq.s32.totalorder %s34, 3
      %p277 = por %p275, %p276
      %p279 = scmp.ne.s32.totalorder %s262, %s278
      %p280 = scmp.eq.s32.totalorder %s34, 0
      %p281 = por %p279, %p280
      %s282 = ssub.s32 %s36, %s43
      %p283 = scmp.eq.s32.totalorder %s282, 0
      %s285 = sadd.s32 %s284, 1
      %s286 = scalar_select %p283, %s284, %s285
      %p289 = pneg %p283
      %p290 = scmp.eq.s32.totalorder %s28, 3
      %p291 = por %p289, %p290
      %p292 = scmp.ne.s32.totalorder %s284, %s287
      %p293 = scmp.eq.s32.totalorder %s28, 0
      %p294 = por %p292, %p293
      %p295 = scmp.ne.s32.totalorder %s284, %s287
      %p296 = scmp.eq.s32.totalorder %s33, 3
      %p297 = por %p295, %p296
      %p298 = scmp.ne.s32.totalorder %s287, %s288
      %p299 = scmp.eq.s32.totalorder %s33, 0
      %p300 = por %p298, %p299
      %p301 = scmp.ne.s32.totalorder %s287, %s288
      %p302 = scmp.eq.s32.totalorder %s34, 3
      %p303 = por %p301, %p302
      %p305 = scmp.ne.s32.totalorder %s288, %s304
      %p306 = scmp.eq.s32.totalorder %s34, 0
      %p307 = por %p305, %p306
      %s308 = ssub.s32 %s36, %s43
      %p309 = scmp.eq.s32.totalorder %s308, 0
      %s311 = sadd.s32 %s310, 1
      %s312 = scalar_select %p309, %s310, %s311
      %p315 = pneg %p309
      %p316 = scmp.eq.s32.totalorder %s28, 3
      %p317 = por %p315, %p316
      %p318 = scmp.ne.s32.totalorder %s310, %s313
      %p319 = scmp.eq.s32.totalorder %s28, 0
      %p320 = por %p318, %p319
      %p321 = scmp.ne.s32.totalorder %s310, %s313
      %p322 = scmp.eq.s32.totalorder %s33, 3
      %p323 = por %p321, %p322
      %p324 = scmp.ne.s32.totalorder %s313, %s314
      %p325 = scmp.eq.s32.totalorder %s33, 0
      %p326 = por %p324, %p325
      %p327 = scmp.ne.s32.totalorder %s313, %s314
      %p328 = scmp.eq.s32.totalorder %s34, 3
      %p329 = por %p327, %p328
      %p331 = scmp.ne.s32.totalorder %s314, %s330
      %p332 = scmp.eq.s32.totalorder %s34, 0
      %p333 = por %p331, %p332
      %s334 = ssub.s32 %s36, %s43
      %p335 = scmp.eq.s32.totalorder %s334, 0
      %s337 = sadd.s32 %s336, 1
      %s338 = scalar_select %p335, %s336, %s337
      %p341 = pneg %p335
      %p342 = scmp.eq.s32.totalorder %s28, 3
      %p343 = por %p341, %p342
      %p344 = scmp.ne.s32.totalorder %s336, %s339
      %p345 = scmp.eq.s32.totalorder %s28, 0
      %p346 = por %p344, %p345
      %p347 = scmp.ne.s32.totalorder %s336, %s339
      %p348 = scmp.eq.s32.totalorder %s33, 3
      %p349 = por %p347, %p348
      %p350 = scmp.ne.s32.totalorder %s339, %s340
      %p351 = scmp.eq.s32.totalorder %s33, 0
      %p352 = por %p350, %p351
      %p353 = scmp.ne.s32.totalorder %s339, %s340
      %p354 = scmp.eq.s32.totalorder %s34, 3
      %p355 = por %p353, %p354
      %p357 = scmp.ne.s32.totalorder %s340, %s356
      %p358 = scmp.eq.s32.totalorder %s34, 0
      %p359 = por %p357, %p358
      %s360 = ssub.s32 %s36, %s43
      %p361 = scmp.eq.s32.totalorder %s360, 0
      %s363 = sadd.s32 %s362, 1
      %s364 = scalar_select %p361, %s362, %s363
      %p367 = pneg %p361
      %p368 = scmp.eq.s32.totalorder %s28, 3
      %p369 = por %p367, %p368
      %p370 = scmp.ne.s32.totalorder %s362, %s365
      %p371 = scmp.eq.s32.totalorder %s28, 0
      %p372 = por %p370, %p371
      %p373 = scmp.ne.s32.totalorder %s362, %s365
      %p374 = scmp.eq.s32.totalorder %s33, 3
      %p375 = por %p373, %p374
      %p376 = scmp.ne.s32.totalorder %s365, %s366
      %p377 = scmp.eq.s32.totalorder %s33, 0
      %p378 = por %p376, %p377
      %p379 = scmp.ne.s32.totalorder %s365, %s366
      %p380 = scmp.eq.s32.totalorder %s34, 3
      %p381 = por %p379, %p380
      %p383 = scmp.ne.s32.totalorder %s366, %s382
      %p384 = scmp.eq.s32.totalorder %s34, 0
      %p385 = por %p383, %p384
      %s386 = ssub.s32 %s36, %s43
      %p387 = scmp.eq.s32.totalorder %s386, 0
      %s389 = sadd.s32 %s388, 1
      %s390 = scalar_select %p387, %s388, %s389
      %p393 = pneg %p387
      %p394 = scmp.eq.s32.totalorder %s28, 3
      %p395 = por %p393, %p394
      %p396 = scmp.ne.s32.totalorder %s388, %s391
      %p397 = scmp.eq.s32.totalorder %s28, 0
      %p398 = por %p396, %p397
      %p399 = scmp.ne.s32.totalorder %s388, %s391
      %p400 = scmp.eq.s32.totalorder %s33, 3
      %p401 = por %p399, %p400
      %p402 = scmp.ne.s32.totalorder %s391, %s392
      %p403 = scmp.eq.s32.totalorder %s33, 0
      %p404 = por %p402, %p403
      %p405 = scmp.ne.s32.totalorder %s391, %s392
      %p406 = scmp.eq.s32.totalorder %s34, 3
      %p407 = por %p405, %p406
      %p409 = scmp.ne.s32.totalorder %s392, %s408
      %p410 = scmp.eq.s32.totalorder %s34, 0
      %p411 = por %p409, %p410
      %s413 = sadd.s32 %s412, 1
      %p416 = scmp.eq.s32.totalorder %s28, 3
      %p417 = scmp.ne.s32.totalorder %s412, %s414
      %p418 = scmp.eq.s32.totalorder %s28, 0
      %p419 = por %p417, %p418
      %p420 = scmp.ne.s32.totalorder %s412, %s414
      %p421 = scmp.eq.s32.totalorder %s33, 3
      %p422 = por %p420, %p421
      %p423 = scmp.ne.s32.totalorder %s414, %s415
      %p424 = scmp.eq.s32.totalorder %s33, 0
      %p425 = por %p423, %p424
      %p426 = scmp.ne.s32.totalorder %s414, %s415
      %p427 = scmp.eq.s32.totalorder %s34, 3
      %p428 = por %p426, %p427
      %p430 = scmp.ne.s32.totalorder %s415, %s429
      %p431 = scmp.eq.s32.totalorder %s34, 0
      %p432 = por %p430, %p431
      %s434 = sadd.s32 %s433, 1
      %p437 = scmp.eq.s32.totalorder %s28, 3
      %p438 = scmp.ne.s32.totalorder %s433, %s435
      %p439 = scmp.eq.s32.totalorder %s28, 0
      %p440 = por %p438, %p439
      %p441 = scmp.ne.s32.totalorder %s433, %s435
      %p442 = scmp.eq.s32.totalorder %s33, 3
      %p443 = por %p441, %p442
      %p444 = scmp.ne.s32.totalorder %s435, %s436
      %p445 = scmp.eq.s32.totalorder %s33, 0
      %p446 = por %p444, %p445
      %p447 = scmp.ne.s32.totalorder %s435, %s436
      %p448 = scmp.eq.s32.totalorder %s34, 3
      %p449 = por %p447, %p448
      %p451 = scmp.ne.s32.totalorder %s436, %s450
      %p452 = scmp.eq.s32.totalorder %s34, 0
      %p453 = por %p451, %p452
      %s454 = ssub.s32 %s35, %s47
      %p455 = scmp.eq.s32.totalorder %s454, 0
      %s457 = sadd.s32 %s456, 1
      %s458 = scalar_select %p455, %s456, %s457
      %p461 = pneg %p455
      %p462 = scmp.eq.s32.totalorder %s28, 3
      %p463 = por %p461, %p462
      %p464 = scmp.ne.s32.totalorder %s456, %s459
      %p465 = scmp.eq.s32.totalorder %s28, 0
      %p466 = por %p464, %p465
      %p467 = scmp.ne.s32.totalorder %s456, %s459
      %p468 = scmp.eq.s32.totalorder %s33, 3
      %p469 = por %p467, %p468
      %p470 = scmp.ne.s32.totalorder %s459, %s460
      %p471 = scmp.eq.s32.totalorder %s33, 0
      %p472 = por %p470, %p471
      %p473 = scmp.ne.s32.totalorder %s459, %s460
      %p474 = scmp.eq.s32.totalorder %s34, 3
      %p475 = por %p473, %p474
      %p477 = scmp.ne.s32.totalorder %s460, %s476
      %p478 = scmp.eq.s32.totalorder %s34, 0
      %p479 = por %p477, %p478
      %p480 = scmp.le.s32.totalorder 1, %s28
      %p481 = scmp.lt.s32.totalorder %s28, 5
      %p482 = pnand %p480, %p481
      %p483 = pneg %p482
      // Predicated region
      $region9: #{tpu_custom_call.1} parent=5 // pred_check
        _
      $region10: #{tpu_custom_call.1} parent=5 // pred_check_branch
        %485 = sbr.rel (%p482) target = $region12
      $region11: #{tpu_custom_call.1} parent=5 // pred_region
        %s486 = ssub.s32 %s28, 1
        // Predicated region
        $region13: #{tpu_custom_call.1} parent=11 // pred_check
          %p487 = pneg %p425
        $region14: #{tpu_custom_call.1} parent=11 // pred_check_branch
          %489 = sbr.rel (%p487) target = $region16
        $region15: #{tpu_custom_call.1} parent=11 // pred_region
          _
        $region16: #{tpu_custom_call.1} parent=11 // pred_fallthru
          _
        // Predicated region
        $region17: #{tpu_custom_call.1} parent=11 // pred_check
          %p490 = pneg %p446
        $region18: #{tpu_custom_call.1} parent=11 // pred_check_branch
          %492 = sbr.rel (%p490) target = $region20
        $region19: #{tpu_custom_call.1} parent=11 // pred_region
          _
        $region20: #{tpu_custom_call.1} parent=11 // pred_fallthru
          _
      $region12: #{tpu_custom_call.1} parent=5 // pred_fallthru
        _
      %p493 = scmp.lt.s32.totalorder %s28, 4
      // Predicated region
      $region21: #{tpu_custom_call.1} parent=5 // pred_check
        %p494 = pneg %p493
      $region22: #{tpu_custom_call.1} parent=5 // pred_check_branch
        %496 = sbr.rel (%p494) target = $region24
      $region23: #{tpu_custom_call.1} parent=5 // pred_region
        // Predicated region
        $region25: #{tpu_custom_call.1} parent=23 // pred_check
          %p497 = pneg %p60
        $region26: #{tpu_custom_call.1} parent=23 // pred_check_branch
          %499 = sbr.rel (%p497) target = $region28
        $region27: #{tpu_custom_call.1} parent=23 // pred_region
          %s500 = sand.u32 %s50, 1
          %s501 = scalar_lea.sflag [#allocation4], %s500
          %s502 = sand.u32 %s50, 1
          %s503 = smul.addr %s502, 8
          %s504 = scalar_lea.vmem [#allocation3], %s503
          %s506 = ssub.s32 128, 128
          %507 = vsyncadd %s501, %s506
          %s508 = smul.addr %s35, 128
          %s509 = scalar_lea.hbm %s0, %s508
          %s511 = sshll.u32 %s504, 4
          %s512 = int_to_ptr.vmem [resolvable:$true] %s511
          %514 = dma.hbm_to_vmem [thread:$0]  %s509, 128, %s512, %s501
        $region28: #{tpu_custom_call.1} parent=23 // pred_fallthru
          _
        // Predicated region
        $region29: #{tpu_custom_call.1} parent=23 // pred_check
          %p515 = pneg %p86
        $region30: #{tpu_custom_call.1} parent=23 // pred_check_branch
          %517 = sbr.rel (%p515) target = $region32
        $region31: #{tpu_custom_call.1} parent=23 // pred_region
          %p518 = scmp.lt.s32.totalorder %s35, 1
          %s519 = scalar_select %p518, %s35, 1
          %s520 = scalar_lea.vmem %s1, %s519
        $region32: #{tpu_custom_call.1} parent=23 // pred_fallthru
          _
        // Predicated region
        $region33: #{tpu_custom_call.1} parent=23 // pred_check
          %p521 = pneg %p112
        $region34: #{tpu_custom_call.1} parent=23 // pred_check_branch
          %523 = sbr.rel (%p521) target = $region36
        $region35: #{tpu_custom_call.1} parent=23 // pred_region
          %p524 = scmp.lt.s32.totalorder %s36, 1
          %s525 = scalar_select %p524, %s36, 1
          %s526 = scalar_lea.vmem %s2, %s525
        $region36: #{tpu_custom_call.1} parent=23 // pred_fallthru
          _
        // Predicated region
        $region37: #{tpu_custom_call.1} parent=23 // pred_check
          %p527 = pneg %p138
        $region38: #{tpu_custom_call.1} parent=23 // pred_check_branch
          %529 = sbr.rel (%p527) target = $region40
        $region39: #{tpu_custom_call.1} parent=23 // pred_region
          %p530 = scmp.lt.s32.totalorder %s36, 1
          %s531 = scalar_select %p530, %s36, 1
          %s532 = scalar_lea.vmem %s3, %s531
        $region40: #{tpu_custom_call.1} parent=23 // pred_fallthru
          _
        // Predicated region
        $region41: #{tpu_custom_call.1} parent=23 // pred_check
          %p533 = pneg %p164
        $region42: #{tpu_custom_call.1} parent=23 // pred_check_branch
          %535 = sbr.rel (%p533) target = $region44
        $region43: #{tpu_custom_call.1} parent=23 // pred_region
          %p536 = scmp.lt.s32.totalorder %s36, 1
          %s537 = scalar_select %p536, %s36, 1
          %s538 = smul.addr %s537, 4
          %s539 = smul.addr %s538, 8
          %s540 = scalar_lea.vmem %s4, %s539
        $region44: #{tpu_custom_call.1} parent=23 // pred_fallthru
          _
        // Predicated region
        $region45: #{tpu_custom_call.1} parent=23 // pred_check
          %p541 = pneg %p190
        $region46: #{tpu_custom_call.1} parent=23 // pred_check_branch
          %543 = sbr.rel (%p541) target = $region48
        $region47: #{tpu_custom_call.1} parent=23 // pred_region
          %p544 = scmp.lt.s32.totalorder %s36, 1
          %s545 = scalar_select %p544, %s36, 1
          %s546 = scalar_lea.vmem %s5, %s545
        $region48: #{tpu_custom_call.1} parent=23 // pred_fallthru
          _
        // Predicated region
        $region49: #{tpu_custom_call.1} parent=23 // pred_check
          %p547 = pneg %p216
        $region50: #{tpu_custom_call.1} parent=23 // pred_check_branch
          %549 = sbr.rel (%p547) target = $region52
        $region51: #{tpu_custom_call.1} parent=23 // pred_region
          %p550 = scmp.lt.s32.totalorder %s36, 1
          %s551 = scalar_select %p550, %s36, 1
          %s552 = smul.addr %s551, 4
          %s553 = smul.addr %s552, 8
          %s554 = scalar_lea.vmem %s6, %s553
        $region52: #{tpu_custom_call.1} parent=23 // pred_fallthru
          _
        // Predicated region
        $region53: #{tpu_custom_call.1} parent=23 // pred_check
          %p555 = pneg %p242
        $region54: #{tpu_custom_call.1} parent=23 // pred_check_branch
          %557 = sbr.rel (%p555) target = $region56
        $region55: #{tpu_custom_call.1} parent=23 // pred_region
          %p558 = scmp.lt.s32.totalorder %s36, 1
          %s559 = scalar_select %p558, %s36, 1
          %s560 = scalar_lea.vmem %s7, %s559
        $region56: #{tpu_custom_call.1} parent=23 // pred_fallthru
          _
        // Predicated region
        $region57: #{tpu_custom_call.1} parent=23 // pred_check
          %p561 = pneg %p268
        $region58: #{tpu_custom_call.1} parent=23 // pred_check_branch
          %563 = sbr.rel (%p561) target = $region60
        $region59: #{tpu_custom_call.1} parent=23 // pred_region
          %p564 = scmp.lt.s32.totalorder %s36, 1
          %s565 = scalar_select %p564, %s36, 1
          %s566 = scalar_lea.vmem %s8, %s565
        $region60: #{tpu_custom_call.1} parent=23 // pred_fallthru
          _
        // Predicated region
        $region61: #{tpu_custom_call.1} parent=23 // pred_check
          %p567 = pneg %p294
        $region62: #{tpu_custom_call.1} parent=23 // pred_check_branch
          %569 = sbr.rel (%p567) target = $region64
        $region63: #{tpu_custom_call.1} parent=23 // pred_region
          %p570 = scmp.lt.s32.totalorder %s36, 1
          %s571 = scalar_select %p570, %s36, 1
          %s572 = scalar_lea.vmem %s9, %s571
        $region64: #{tpu_custom_call.1} parent=23 // pred_fallthru
          _
        // Predicated region
        $region65: #{tpu_custom_call.1} parent=23 // pred_check
          %p573 = pneg %p320
        $region66: #{tpu_custom_call.1} parent=23 // pred_check_branch
          %575 = sbr.rel (%p573) target = $region68
        $region67: #{tpu_custom_call.1} parent=23 // pred_region
          %p576 = scmp.lt.s32.totalorder %s36, 1
          %s577 = scalar_select %p576, %s36, 1
          %s578 = smul.addr %s577, 4
          %s579 = smul.addr %s578, 8
          %s580 = scalar_lea.vmem %s10, %s579
        $region68: #{tpu_custom_call.1} parent=23 // pred_fallthru
          _
        // Predicated region
        $region69: #{tpu_custom_call.1} parent=23 // pred_check
          %p581 = pneg %p346
        $region70: #{tpu_custom_call.1} parent=23 // pred_check_branch
          %583 = sbr.rel (%p581) target = $region72
        $region71: #{tpu_custom_call.1} parent=23 // pred_region
          %p584 = scmp.lt.s32.totalorder %s36, 1
          %s585 = scalar_select %p584, %s36, 1
          %s586 = scalar_lea.vmem %s11, %s585
        $region72: #{tpu_custom_call.1} parent=23 // pred_fallthru
          _
        // Predicated region
        $region73: #{tpu_custom_call.1} parent=23 // pred_check
          %p587 = pneg %p372
        $region74: #{tpu_custom_call.1} parent=23 // pred_check_branch
          %589 = sbr.rel (%p587) target = $region76
        $region75: #{tpu_custom_call.1} parent=23 // pred_region
          %p590 = scmp.lt.s32.totalorder %s36, 1
          %s591 = scalar_select %p590, %s36, 1
          %s592 = smul.addr %s591, 8
          %s593 = smul.addr %s592, 8
          %s594 = scalar_lea.vmem %s12, %s593
        $region76: #{tpu_custom_call.1} parent=23 // pred_fallthru
          _
        // Predicated region
        $region77: #{tpu_custom_call.1} parent=23 // pred_check
          %p595 = pneg %p398
        $region78: #{tpu_custom_call.1} parent=23 // pred_check_branch
          %597 = sbr.rel (%p595) target = $region80
        $region79: #{tpu_custom_call.1} parent=23 // pred_region
          %p598 = scmp.lt.s32.totalorder %s36, 1
          %s599 = scalar_select %p598, %s36, 1
          %s600 = scalar_lea.vmem %s13, %s599
        $region80: #{tpu_custom_call.1} parent=23 // pred_fallthru
          _
      $region24: #{tpu_custom_call.1} parent=5 // pred_fallthru
        _
      %p601 = scmp.le.s32.totalorder 1, %s28
      %p602 = scmp.lt.s32.totalorder %s28, 5
      %p603 = pnand %p601, %p602
      %p604 = pneg %p603
      // Predicated region
      $region81: #{tpu_custom_call.1} parent=5 // pred_check
        _
      $region82: #{tpu_custom_call.1} parent=5 // pred_check_branch
        %606 = sbr.rel (%p603) target = $region84
      $region83: #{tpu_custom_call.1} parent=5 // pred_region
        %s607 = ssub.s32 %s28, 1
        %s608 = sand.u32 %s53, 1
        %s609 = scalar_lea.sflag [#allocation4], %s608
        %s610 = sand.u32 %s53, 1
        %s611 = smul.addr %s610, 8
        %s612 = scalar_lea.vmem [#allocation3], %s611
        // Predicated region
        $region85: #{tpu_custom_call.1} parent=83 // pred_check
          %p613 = pneg %p66
        $region86: #{tpu_custom_call.1} parent=83 // pred_check_branch
          %615 = sbr.rel (%p613) target = $region88
        $region87: #{tpu_custom_call.1} parent=83 // pred_region
          %616 = dma.done %s609, 128
        $region88: #{tpu_custom_call.1} parent=83 // pred_fallthru
          _
        %s617 = sand.u32 %s53, 1
        %s618 = scalar_lea.sflag [#allocation4], %s617
        %s619 = sand.u32 %s53, 1
        %s620 = smul.addr %s619, 8
        %s621 = scalar_lea.vmem [#allocation3], %s620
        %p622 = pneg %p66
        %p623 = pneg %p63
        %p624 = scmp.lt.s32.totalorder %s37, 1
        %s625 = scalar_select %p624, %s37, 1
        %s626 = scalar_lea.vmem %s1, %s625
        %p627 = pneg %p92
        %p628 = pneg %p89
        %p629 = scmp.lt.s32.totalorder %s38, 1
        %s630 = scalar_select %p629, %s38, 1
        %s631 = scalar_lea.vmem %s2, %s630
        %p632 = pneg %p118
        %p633 = pneg %p115
        %p634 = scmp.lt.s32.totalorder %s38, 1
        %s635 = scalar_select %p634, %s38, 1
        %s636 = scalar_lea.vmem %s3, %s635
        %p637 = pneg %p144
        %p638 = pneg %p141
        %p639 = scmp.lt.s32.totalorder %s38, 1
        %s640 = scalar_select %p639, %s38, 1
        %s641 = smul.addr %s640, 4
        %s642 = smul.addr %s641, 8
        %s643 = scalar_lea.vmem %s4, %s642
        %p644 = pneg %p170
        %p645 = pneg %p167
        %p646 = scmp.lt.s32.totalorder %s38, 1
        %s647 = scalar_select %p646, %s38, 1
        %s648 = scalar_lea.vmem %s5, %s647
        %p649 = pneg %p196
        %p650 = pneg %p193
        %p651 = scmp.lt.s32.totalorder %s38, 1
        %s652 = scalar_select %p651, %s38, 1
        %s653 = smul.addr %s652, 4
        %s654 = smul.addr %s653, 8
        %s655 = scalar_lea.vmem %s6, %s654
        %p656 = pneg %p222
        %p657 = pneg %p219
        %p658 = scmp.lt.s32.totalorder %s38, 1
        %s659 = scalar_select %p658, %s38, 1
        %s660 = scalar_lea.vmem %s7, %s659
        %p661 = pneg %p248
        %p662 = pneg %p245
        %p663 = scmp.lt.s32.totalorder %s38, 1
        %s664 = scalar_select %p663, %s38, 1
        %s665 = scalar_lea.vmem %s8, %s664
        %p666 = pneg %p274
        %p667 = pneg %p271
        %p668 = scmp.lt.s32.totalorder %s38, 1
        %s669 = scalar_select %p668, %s38, 1
        %s670 = scalar_lea.vmem %s9, %s669
        %p671 = pneg %p300
        %p672 = pneg %p297
        %p673 = scmp.lt.s32.totalorder %s38, 1
        %s674 = scalar_select %p673, %s38, 1
        %s675 = smul.addr %s674, 4
        %s676 = smul.addr %s675, 8
        %s677 = scalar_lea.vmem %s10, %s676
        %p678 = pneg %p326
        %p679 = pneg %p323
        %p680 = scmp.lt.s32.totalorder %s38, 1
        %s681 = scalar_select %p680, %s38, 1
        %s682 = scalar_lea.vmem %s11, %s681
        %p683 = pneg %p352
        %p684 = pneg %p349
        %p685 = scmp.lt.s32.totalorder %s38, 1
        %s686 = scalar_select %p685, %s38, 1
        %s687 = smul.addr %s686, 8
        %s688 = smul.addr %s687, 8
        %s689 = scalar_lea.vmem %s12, %s688
        %p690 = pneg %p378
        %p691 = pneg %p375
        %p692 = scmp.lt.s32.totalorder %s38, 1
        %s693 = scalar_select %p692, %s38, 1
        %s694 = scalar_lea.vmem %s13, %s693
        %p695 = pneg %p404
        %p696 = pneg %p401
        %p697 = pneg %p425
        %p698 = pneg %p422
        %p699 = pneg %p446
        %p700 = pneg %p443
        %p701 = pneg %p472
        %p702 = pneg %p469
        %s703 = sand.u32 %s459, 1
        %s704 = scalar_lea.sflag [#allocation5], %s703
        %s705 = sand.u32 %s459, 1
        %s706 = smul.addr %s705, 8
        %s707 = scalar_lea.vmem [#allocation6], %s706
        %p708 = scmp.lt.s32.totalorder %s37, 1
        %s709 = scalar_select %p708, %s37, 1
        %s710 = scalar_lea.vmem %s1, %s709
        %p711 = scmp.lt.s32.totalorder %s38, 1
        %s712 = scalar_select %p711, %s38, 1
        %s713 = scalar_lea.vmem %s2, %s712
        %p714 = scmp.lt.s32.totalorder %s38, 1
        %s715 = scalar_select %p714, %s38, 1
        %s716 = scalar_lea.vmem %s3, %s715
        %p717 = scmp.lt.s32.totalorder %s38, 1
        %s718 = scalar_select %p717, %s38, 1
        %s719 = smul.addr %s718, 4
        %s720 = smul.addr %s719, 8
        %s721 = scalar_lea.vmem %s4, %s720
        %p722 = scmp.lt.s32.totalorder %s38, 1
        %s723 = scalar_select %p722, %s38, 1
        %s724 = scalar_lea.vmem %s5, %s723
        %p725 = scmp.lt.s32.totalorder %s38, 1
        %s726 = scalar_select %p725, %s38, 1
        %s727 = smul.addr %s726, 4
        %s728 = smul.addr %s727, 8
        %s729 = scalar_lea.vmem %s6, %s728
        %p730 = scmp.lt.s32.totalorder %s38, 1
        %s731 = scalar_select %p730, %s38, 1
        %s732 = scalar_lea.vmem %s7, %s731
        %p733 = scmp.lt.s32.totalorder %s38, 1
        %s734 = scalar_select %p733, %s38, 1
        %s735 = scalar_lea.vmem %s8, %s734
        %p736 = scmp.lt.s32.totalorder %s38, 1
        %s737 = scalar_select %p736, %s38, 1
        %s738 = scalar_lea.vmem %s9, %s737
        %p739 = scmp.lt.s32.totalorder %s38, 1
        %s740 = scalar_select %p739, %s38, 1
        %s741 = smul.addr %s740, 4
        %s742 = smul.addr %s741, 8
        %s743 = scalar_lea.vmem %s10, %s742
        %p744 = scmp.lt.s32.totalorder %s38, 1
        %s745 = scalar_select %p744, %s38, 1
        %s746 = scalar_lea.vmem %s11, %s745
        %p747 = scmp.lt.s32.totalorder %s38, 1
        %s748 = scalar_select %p747, %s38, 1
        %s749 = smul.addr %s748, 8
        %s750 = smul.addr %s749, 8
        %s751 = scalar_lea.vmem %s12, %s750
        %p752 = scmp.lt.s32.totalorder %s38, 1
        %s753 = scalar_select %p752, %s38, 1
        %s754 = scalar_lea.vmem %s13, %s753
        %p755 = scmp.eq.s32.totalorder %s38, 0
        // Predicated region
        $region89: #{tpu_custom_call.1} parent=83 // pred_check
          %p756 = pneg %p755
        $region90: #{tpu_custom_call.1} parent=83 // pred_check_branch
          %758 = sbr.rel (%p756) target = $region92
        $region91: #{tpu_custom_call.1} parent=83 // pred_region
          %v759 = vld [vmem:[%s612] sm:$0xff]
          %vm760 = vcmask 261120
          %761 = vst.msk [vmem:[#allocation2] sm:$0xff] %vm760, %v759
        $region92: #{tpu_custom_call.1} parent=83 // pred_fallthru
          _
        %v762 = vld [vmem:[#allocation2] sm:$0xff]
        %v763 = vld [vmem:[%s713] sm:$0x1]
        %v764 = vld [vmem:[%s716] sm:$0x1]
        %vm765 = vcmask 261120
        %v766 = vsel %vm765, %v762, 0.0
        %767 = vadd.xlane.f32.xlu0 %v766
        %v768 = vpop.xlane.xlu0 %767
        %v769 = vrcp.pop 32.0
        %v770 = vmul.f32 %v768, %v769
        %v771 = vsub.f32 %v762, %v770
        %v772 = vmul.f32 %v771, %v771
        %v773 = vsel %vm765, %v772, 0.0
        %774 = vadd.xlane.f32.xlu0 %v773
        %v775 = vpop.xlane.xlu0 %774
        %v776 = vmul.f32 %v775, %v769
        %v777 = vadd.f32 %v776, 1e-05
        %v778 = vrsqrt.pop %v777
        %v779 = vmul.f32 %v771, %v778
        %v781 = vlaneseq
        %v782 = vshrl.u32 %v781, 7
        %v783 = vsub.s32 0, %v782
        %v784 = vrot.slane %v763, %v783
        %v786 = vmul.f32 %v779, %v784
        %v788 = vlaneseq
        %v789 = vshrl.u32 %v788, 7
        %v790 = vsub.s32 0, %v789
        %v791 = vrot.slane %v764, %v790
        %v793 = vadd.f32 %v786, %v791
        %v794 = vld [vmem:[%s721] sm:$0xff]
        %v795 = vld [vmem:[%s721 + $0x8] sm:$0xff]
        %v796 = vld [vmem:[%s721 + $0x10] sm:$0xff]
        %v797 = vld [vmem:[%s721 + $0x18] sm:$0xff]
        %v798 = vld [vmem:[%s724] sm:$0x1]
        %v800 = vlaneseq
        %v801 = vshrl.u32 %v800, 7
        %v802 = vsub.s32 0, %v801
        %v803 = vrot.slane %v798, %v802
        %v806 = vsel %vm765, %v793, 0
        %808 = vmatprep.subr.mxu0 0.0
        %809 = vmatpush1.msra.mxu0 %v794
        %810 = vmatprep.subr.mxu0 0.0
        %811 = vmatpush1.msra.mxu0 %v795
        %812 = vmatprep.subr.mxu0 0.0
        %813 = vmatpush1.msra.mxu0 %v796
        %814 = vmatprep.subr.mxu0 0.0
        %815 = vmatpush1.msra.mxu0 %v797
        %816 = vmatprep.subr.mxu0 0.0
        %817 = vmatpush1.msra.mxu0 0.0
        %818 = vmatprep.subr.mxu0 0.0
        %819 = vmatpush1.msra.mxu0 0.0
        %820 = vmatprep.subr.mxu0 0.0
        %821 = vmatpush1.msra.mxu0 0.0
        %822 = vmatprep.subr.mxu0 0.0
        %823 = vmatpush1.msra.mxu0 0.0
        %824 = vmatprep.subr.mxu0 0.0
        %825 = vmatpush1.msra.mxu0 0.0
        %826 = vmatprep.subr.mxu0 0.0
        %827 = vmatpush1.msra.mxu0 0.0
        %828 = vmatprep.subr.mxu0 0.0
        %829 = vmatpush1.msra.mxu0 0.0
        %830 = vmatprep.subr.mxu0 0.0
        %831 = vmatpush1.msra.mxu0 0.0
        %832 = vmatprep.subr.mxu0 0.0
        %833 = vmatpush1.msra.mxu0 0.0
        %834 = vmatprep.subr.mxu0 0.0
        %835 = vmatpush1.msra.mxu0 0.0
        %836 = vmatprep.subr.mxu0 0.0
        %837 = vmatpush1.msra.mxu0 0.0
        %838 = vmatprep.subr.mxu0 0.0
        %839 = vmatpush1.msra.mxu0 0.0
        %840 = vmatprep.subr.mxu0 0.0
        %841 = vmatpush1.msra.mxu0 0.0
        %842 = vmatprep.subr.mxu0 0.0
        %843 = vmatpush1.msra.mxu0 0.0
        %844 = vmatprep.subr.mxu0 0.0
        %845 = vmatpush1.msra.mxu0 0.0
        %846 = vmatprep.subr.mxu0 0.0
        %847 = vmatpush1.msra.mxu0 0.0
        %848 = vmatprep.subr.mxu0 0.0
        %849 = vmatpush1.msra.mxu0 0.0
        %850 = vmatprep.subr.mxu0 0.0
        %851 = vmatpush1.msra.mxu0 0.0
        %852 = vmatprep.subr.mxu0 0.0
        %853 = vmatpush1.msra.mxu0 0.0
        %854 = vmatprep.subr.mxu0 0.0
        %855 = vmatpush1.msra.mxu0 0.0
        %856 = vmatprep.subr.mxu0 0.0
        %857 = vmatpush1.msra.mxu0 0.0
        %858 = vmatprep.subr.mxu0 0.0
        %859 = vmatpush1.msra.mxu0 0.0
        %860 = vmatprep.subr.mxu0 0.0
        %861 = vmatpush1.msra.mxu0 0.0
        %862 = vmatprep.subr.mxu0 0.0
        %863 = vmatpush1.msra.mxu0 0.0
        %864 = vmatprep.subr.mxu0 0.0
        %865 = vmatpush1.msra.mxu0 0.0
        %866 = vmatprep.subr.mxu0 0.0
        %867 = vmatpush1.msra.mxu0 0.0
        %868 = vmatprep.subr.mxu0 0.0
        %869 = vmatpush1.msra.mxu0 0.0
        %870 = vmatprep.subr.mxu0 0.0
        %871 = vmatpush1.msra.mxu0 0.0
        %872 = vmatprep.mubr.f32.mxu0 0.0
        %873 = vmatmul.mubr.f32.gmra.mrb[0].mxu0 %v806
        %v874 = vpop.f32.mrb[0].mxu0
        %v875 = vadd.f32 %v803, %v874
        %v876 = vpop.f32.mrb[0].mxu0
        %877 = vdwg.mxu0
        %879 = vrot.lane.b32.xlu0 %v875, 120
        %v880 = vpop.permute.xlu0 %879
        %882 = vrot.lane.b32.xlu0 %v875, 112
        %v883 = vpop.permute.xlu0 %882
        %885 = vrot.lane.b32.xlu0 %v875, 104
        %v886 = vpop.permute.xlu0 %885
        %v888 = vcombine.low %v875, %v883
        %v889 = vcombine.high %v875, %v883
        %v891 = vunpack.c.l.s4 1983009808
        %v892 = vunpack.c.0.s8 %v891
        %v893 = vlaneseq
        %v894 = vshrl.u32 %v893, 7
        %v895 = vsub.s32 %v892, %v894
        %v896 = vrot.slane %v888, %v895
        %v898 = vunpack.c.l.s4 1983009808
        %v899 = vunpack.c.0.s8 %v898
        %v900 = vlaneseq
        %v901 = vshrl.u32 %v900, 7
        %v902 = vsub.s32 %v899, %v901
        %v903 = vrot.slane %v889, %v902
        %v904 = vcombine.low %v880, %v886
        %v905 = vcombine.high %v880, %v886
        %v907 = vunpack.c.l.s4 1983009808
        %v908 = vunpack.c.0.s8 %v907
        %v909 = vlaneseq
        %v910 = vshrl.u32 %v909, 7
        %v911 = vsub.s32 %v908, %v910
        %v912 = vrot.slane %v904, %v911
        %v914 = vunpack.c.l.s4 1983009808
        %v915 = vunpack.c.0.s8 %v914
        %v916 = vlaneseq
        %v917 = vshrl.u32 %v916, 7
        %v918 = vsub.s32 %v915, %v917
        %v919 = vrot.slane %v905, %v918
        %v920 = vcombine.low %v896, %v912
        %v921 = vcombine.high %v896, %v912
        %v923 = vunpack.c.l.s4 1934713408
        %v924 = vunpack.c.0.s8 %v923
        %v925 = vlaneseq
        %v926 = vshrl.u32 %v925, 7
        %v927 = vsub.s32 %v924, %v926
        %v928 = vrot.slane %v920, %v927
        %v930 = vunpack.c.l.s4 1934713408
        %v931 = vunpack.c.0.s8 %v930
        %v932 = vlaneseq
        %v933 = vshrl.u32 %v932, 7
        %v934 = vsub.s32 %v931, %v933
        %v935 = vrot.slane %v921, %v934
        %v936 = vcombine.low %v903, %v919
        %v937 = vcombine.high %v903, %v919
        %v939 = vunpack.c.l.s4 1934713408
        %v940 = vunpack.c.0.s8 %v939
        %v941 = vlaneseq
        %v942 = vshrl.u32 %v941, 7
        %v943 = vsub.s32 %v940, %v942
        %v944 = vrot.slane %v936, %v943
        %v946 = vunpack.c.l.s4 1934713408
        %v947 = vunpack.c.0.s8 %v946
        %v948 = vlaneseq
        %v949 = vshrl.u32 %v948, 7
        %v950 = vsub.s32 %v947, %v949
        %v951 = vrot.slane %v937, %v950
        %v952 = vcombine.high %v928, 0.0
        %v953 = vcombine.high %v935, 0.0
        %v954 = vcombine.high %v944, 0.0
        %v955 = vcombine.high %v951, 0.0
        %v956 = vcombine.low %v928, %v935
        %v958 = vunpack.c.l.s4 1983009808
        %v959 = vunpack.c.0.s8 %v958
        %v960 = vlaneseq
        %v961 = vshrl.u32 %v960, 7
        %v962 = vsub.s32 %v959, %v961
        %v963 = vrot.slane %v956, %v962
        %v964 = vcombine.low %v952, %v953
        %v966 = vunpack.c.l.s4 1983009808
        %v967 = vunpack.c.0.s8 %v966
        %v968 = vlaneseq
        %v969 = vshrl.u32 %v968, 7
        %v970 = vsub.s32 %v967, %v969
        %v971 = vrot.slane %v964, %v970
        %v972 = vcombine.low %v944, %v951
        %v974 = vunpack.c.l.s4 1983009808
        %v975 = vunpack.c.0.s8 %v974
        %v976 = vlaneseq
        %v977 = vshrl.u32 %v976, 7
        %v978 = vsub.s32 %v975, %v977
        %v979 = vrot.slane %v972, %v978
        %v980 = vcombine.low %v954, %v955
        %v982 = vunpack.c.l.s4 1983009808
        %v983 = vunpack.c.0.s8 %v982
        %v984 = vlaneseq
        %v985 = vshrl.u32 %v984, 7
        %v986 = vsub.s32 %v983, %v985
        %v987 = vrot.slane %v980, %v986
        %v988 = vcombine.low %v963, %v971
        %v989 = vcombine.high %v963, %v971
        %v991 = vunpack.c.l.s4 1934713408
        %v992 = vunpack.c.0.s8 %v991
        %v993 = vlaneseq
        %v994 = vshrl.u32 %v993, 7
        %v995 = vsub.s32 %v992, %v994
        %v996 = vrot.slane %v988, %v995
        %v998 = vunpack.c.l.s4 1934713408
        %v999 = vunpack.c.0.s8 %v998
        %v1000 = vlaneseq
        %v1001 = vshrl.u32 %v1000, 7
        %v1002 = vsub.s32 %v999, %v1001
        %v1003 = vrot.slane %v989, %v1002
        %v1004 = vcombine.low %v979, %v987
        %v1005 = vcombine.high %v979, %v987
        %v1007 = vunpack.c.l.s4 1934713408
        %v1008 = vunpack.c.0.s8 %v1007
        %v1009 = vlaneseq
        %v1010 = vshrl.u32 %v1009, 7
        %v1011 = vsub.s32 %v1008, %v1010
        %v1012 = vrot.slane %v1004, %v1011
        %v1014 = vunpack.c.l.s4 1934713408
        %v1015 = vunpack.c.0.s8 %v1014
        %v1016 = vlaneseq
        %v1017 = vshrl.u32 %v1016, 7
        %v1018 = vsub.s32 %v1015, %v1017
        %v1019 = vrot.slane %v1005, %v1018
        %v1020 = vcombine.low %v996, %v1012
        %v1021 = vcombine.high %v996, %v1012
        %v1022 = vcombine.low %v1003, %v1019
        %v1023 = vcombine.high %v1003, %v1019
        %1024 = vrot.lane.b32.xlu0 %v875, 96
        %v1025 = vpop.permute.xlu0 %1024
        %1026 = vrot.lane.b32.xlu0 %v880, 96
        %v1027 = vpop.permute.xlu0 %1026
        %1028 = vrot.lane.b32.xlu0 %v883, 96
        %v1029 = vpop.permute.xlu0 %1028
        %1030 = vrot.lane.b32.xlu0 %v886, 96
        %v1031 = vpop.permute.xlu0 %1030
        %v1036 = vcombine.low %v1025, %v1029
        %v1037 = vcombine.high %v1025, %v1029
        %v1039 = vunpack.c.l.s4 1983009808
        %v1040 = vunpack.c.0.s8 %v1039
        %v1041 = vlaneseq
        %v1042 = vshrl.u32 %v1041, 7
        %v1043 = vsub.s32 %v1040, %v1042
        %v1044 = vrot.slane %v1036, %v1043
        %v1046 = vunpack.c.l.s4 1983009808
        %v1047 = vunpack.c.0.s8 %v1046
        %v1048 = vlaneseq
        %v1049 = vshrl.u32 %v1048, 7
        %v1050 = vsub.s32 %v1047, %v1049
        %v1051 = vrot.slane %v1037, %v1050
        %v1052 = vcombine.low %v1027, %v1031
        %v1053 = vcombine.high %v1027, %v1031
        %v1055 = vunpack.c.l.s4 1983009808
        %v1056 = vunpack.c.0.s8 %v1055
        %v1057 = vlaneseq
        %v1058 = vshrl.u32 %v1057, 7
        %v1059 = vsub.s32 %v1056, %v1058
        %v1060 = vrot.slane %v1052, %v1059
        %v1062 = vunpack.c.l.s4 1983009808
        %v1063 = vunpack.c.0.s8 %v1062
        %v1064 = vlaneseq
        %v1065 = vshrl.u32 %v1064, 7
        %v1066 = vsub.s32 %v1063, %v1065
        %v1067 = vrot.slane %v1053, %v1066
        %v1068 = vcombine.low %v1044, %v1060
        %v1069 = vcombine.high %v1044, %v1060
        %v1071 = vunpack.c.l.s4 1934713408
        %v1072 = vunpack.c.0.s8 %v1071
        %v1073 = vlaneseq
        %v1074 = vshrl.u32 %v1073, 7
        %v1075 = vsub.s32 %v1072, %v1074
        %v1076 = vrot.slane %v1068, %v1075
        %v1078 = vunpack.c.l.s4 1934713408
        %v1079 = vunpack.c.0.s8 %v1078
        %v1080 = vlaneseq
        %v1081 = vshrl.u32 %v1080, 7
        %v1082 = vsub.s32 %v1079, %v1081
        %v1083 = vrot.slane %v1069, %v1082
        %v1084 = vcombine.low %v1051, %v1067
        %v1085 = vcombine.high %v1051, %v1067
        %v1087 = vunpack.c.l.s4 1934713408
        %v1088 = vunpack.c.0.s8 %v1087
        %v1089 = vlaneseq
        %v1090 = vshrl.u32 %v1089, 7
        %v1091 = vsub.s32 %v1088, %v1090
        %v1092 = vrot.slane %v1084, %v1091
        %v1094 = vunpack.c.l.s4 1934713408
        %v1095 = vunpack.c.0.s8 %v1094
        %v1096 = vlaneseq
        %v1097 = vshrl.u32 %v1096, 7
        %v1098 = vsub.s32 %v1095, %v1097
        %v1099 = vrot.slane %v1085, %v1098
        %v1100 = vcombine.high %v1076, 0.0
        %v1101 = vcombine.high %v1083, 0.0
        %v1102 = vcombine.high %v1092, 0.0
        %v1103 = vcombine.high %v1099, 0.0
        %v1104 = vcombine.low %v1076, %v1083
        %v1106 = vunpack.c.l.s4 1983009808
        %v1107 = vunpack.c.0.s8 %v1106
        %v1108 = vlaneseq
        %v1109 = vshrl.u32 %v1108, 7
        %v1110 = vsub.s32 %v1107, %v1109
        %v1111 = vrot.slane %v1104, %v1110
        %v1112 = vcombine.low %v1100, %v1101
        %v1114 = vunpack.c.l.s4 1983009808
        %v1115 = vunpack.c.0.s8 %v1114
        %v1116 = vlaneseq
        %v1117 = vshrl.u32 %v1116, 7
        %v1118 = vsub.s32 %v1115, %v1117
        %v1119 = vrot.slane %v1112, %v1118
        %v1120 = vcombine.low %v1092, %v1099
        %v1122 = vunpack.c.l.s4 1983009808
        %v1123 = vunpack.c.0.s8 %v1122
        %v1124 = vlaneseq
        %v1125 = vshrl.u32 %v1124, 7
        %v1126 = vsub.s32 %v1123, %v1125
        %v1127 = vrot.slane %v1120, %v1126
        %v1128 = vcombine.low %v1102, %v1103
        %v1130 = vunpack.c.l.s4 1983009808
        %v1131 = vunpack.c.0.s8 %v1130
        %v1132 = vlaneseq
        %v1133 = vshrl.u32 %v1132, 7
        %v1134 = vsub.s32 %v1131, %v1133
        %v1135 = vrot.slane %v1128, %v1134
        %v1136 = vcombine.low %v1111, %v1119
        %v1137 = vcombine.high %v1111, %v1119
        %v1139 = vunpack.c.l.s4 1934713408
        %v1140 = vunpack.c.0.s8 %v1139
        %v1141 = vlaneseq
        %v1142 = vshrl.u32 %v1141, 7
        %v1143 = vsub.s32 %v1140, %v1142
        %v1144 = vrot.slane %v1136, %v1143
        %v1146 = vunpack.c.l.s4 1934713408
        %v1147 = vunpack.c.0.s8 %v1146
        %v1148 = vlaneseq
        %v1149 = vshrl.u32 %v1148, 7
        %v1150 = vsub.s32 %v1147, %v1149
        %v1151 = vrot.slane %v1137, %v1150
        %v1152 = vcombine.low %v1127, %v1135
        %v1153 = vcombine.high %v1127, %v1135
        %v1155 = vunpack.c.l.s4 1934713408
        %v1156 = vunpack.c.0.s8 %v1155
        %v1157 = vlaneseq
        %v1158 = vshrl.u32 %v1157, 7
        %v1159 = vsub.s32 %v1156, %v1158
        %v1160 = vrot.slane %v1152, %v1159
        %v1162 = vunpack.c.l.s4 1934713408
        %v1163 = vunpack.c.0.s8 %v1162
        %v1164 = vlaneseq
        %v1165 = vshrl.u32 %v1164, 7
        %v1166 = vsub.s32 %v1163, %v1165
        %v1167 = vrot.slane %v1153, %v1166
        %v1168 = vcombine.low %v1144, %v1160
        %v1169 = vcombine.high %v1144, %v1160
        %v1170 = vcombine.low %v1151, %v1167
        %v1171 = vcombine.high %v1151, %v1167
        %1172 = vrot.lane.b32.xlu0 %v875, 64
        %v1173 = vpop.permute.xlu0 %1172
        %1174 = vrot.lane.b32.xlu0 %v880, 64
        %v1175 = vpop.permute.xlu0 %1174
        %1176 = vrot.lane.b32.xlu0 %v883, 64
        %v1177 = vpop.permute.xlu0 %1176
        %1178 = vrot.lane.b32.xlu0 %v886, 64
        %v1179 = vpop.permute.xlu0 %1178
        %v1184 = vcombine.low %v1173, %v1177
        %v1185 = vcombine.high %v1173, %v1177
        %v1187 = vunpack.c.l.s4 1983009808
        %v1188 = vunpack.c.0.s8 %v1187
        %v1189 = vlaneseq
        %v1190 = vshrl.u32 %v1189, 7
        %v1191 = vsub.s32 %v1188, %v1190
        %v1192 = vrot.slane %v1184, %v1191
        %v1194 = vunpack.c.l.s4 1983009808
        %v1195 = vunpack.c.0.s8 %v1194
        %v1196 = vlaneseq
        %v1197 = vshrl.u32 %v1196, 7
        %v1198 = vsub.s32 %v1195, %v1197
        %v1199 = vrot.slane %v1185, %v1198
        %v1200 = vcombine.low %v1175, %v1179
        %v1201 = vcombine.high %v1175, %v1179
        %v1203 = vunpack.c.l.s4 1983009808
        %v1204 = vunpack.c.0.s8 %v1203
        %v1205 = vlaneseq
        %v1206 = vshrl.u32 %v1205, 7
        %v1207 = vsub.s32 %v1204, %v1206
        %v1208 = vrot.slane %v1200, %v1207
        %v1210 = vunpack.c.l.s4 1983009808
        %v1211 = vunpack.c.0.s8 %v1210
        %v1212 = vlaneseq
        %v1213 = vshrl.u32 %v1212, 7
        %v1214 = vsub.s32 %v1211, %v1213
        %v1215 = vrot.slane %v1201, %v1214
        %v1216 = vcombine.low %v1192, %v1208
        %v1217 = vcombine.high %v1192, %v1208
        %v1219 = vunpack.c.l.s4 1934713408
        %v1220 = vunpack.c.0.s8 %v1219
        %v1221 = vlaneseq
        %v1222 = vshrl.u32 %v1221, 7
        %v1223 = vsub.s32 %v1220, %v1222
        %v1224 = vrot.slane %v1216, %v1223
        %v1226 = vunpack.c.l.s4 1934713408
        %v1227 = vunpack.c.0.s8 %v1226
        %v1228 = vlaneseq
        %v1229 = vshrl.u32 %v1228, 7
        %v1230 = vsub.s32 %v1227, %v1229
        %v1231 = vrot.slane %v1217, %v1230
        %v1232 = vcombine.low %v1199, %v1215
        %v1233 = vcombine.high %v1199, %v1215
        %v1235 = vunpack.c.l.s4 1934713408
        %v1236 = vunpack.c.0.s8 %v1235
        %v1237 = vlaneseq
        %v1238 = vshrl.u32 %v1237, 7
        %v1239 = vsub.s32 %v1236, %v1238
        %v1240 = vrot.slane %v1232, %v1239
        %v1242 = vunpack.c.l.s4 1934713408
        %v1243 = vunpack.c.0.s8 %v1242
        %v1244 = vlaneseq
        %v1245 = vshrl.u32 %v1244, 7
        %v1246 = vsub.s32 %v1243, %v1245
        %v1247 = vrot.slane %v1233, %v1246
        %v1248 = vcombine.high %v1224, 0.0
        %v1249 = vcombine.high %v1231, 0.0
        %v1250 = vcombine.high %v1240, 0.0
        %v1251 = vcombine.high %v1247, 0.0
        %v1252 = vcombine.low %v1224, %v1231
        %v1254 = vunpack.c.l.s4 1983009808
        %v1255 = vunpack.c.0.s8 %v1254
        %v1256 = vlaneseq
        %v1257 = vshrl.u32 %v1256, 7
        %v1258 = vsub.s32 %v1255, %v1257
        %v1259 = vrot.slane %v1252, %v1258
        %v1260 = vcombine.low %v1248, %v1249
        %v1262 = vunpack.c.l.s4 1983009808
        %v1263 = vunpack.c.0.s8 %v1262
        %v1264 = vlaneseq
        %v1265 = vshrl.u32 %v1264, 7
        %v1266 = vsub.s32 %v1263, %v1265
        %v1267 = vrot.slane %v1260, %v1266
        %v1268 = vcombine.low %v1240, %v1247
        %v1270 = vunpack.c.l.s4 1983009808
        %v1271 = vunpack.c.0.s8 %v1270
        %v1272 = vlaneseq
        %v1273 = vshrl.u32 %v1272, 7
        %v1274 = vsub.s32 %v1271, %v1273
        %v1275 = vrot.slane %v1268, %v1274
        %v1276 = vcombine.low %v1250, %v1251
        %v1278 = vunpack.c.l.s4 1983009808
        %v1279 = vunpack.c.0.s8 %v1278
        %v1280 = vlaneseq
        %v1281 = vshrl.u32 %v1280, 7
        %v1282 = vsub.s32 %v1279, %v1281
        %v1283 = vrot.slane %v1276, %v1282
        %v1284 = vcombine.low %v1259, %v1267
        %v1285 = vcombine.high %v1259, %v1267
        %v1287 = vunpack.c.l.s4 1934713408
        %v1288 = vunpack.c.0.s8 %v1287
        %v1289 = vlaneseq
        %v1290 = vshrl.u32 %v1289, 7
        %v1291 = vsub.s32 %v1288, %v1290
        %v1292 = vrot.slane %v1284, %v1291
        %v1294 = vunpack.c.l.s4 1934713408
        %v1295 = vunpack.c.0.s8 %v1294
        %v1296 = vlaneseq
        %v1297 = vshrl.u32 %v1296, 7
        %v1298 = vsub.s32 %v1295, %v1297
        %v1299 = vrot.slane %v1285, %v1298
        %v1300 = vcombine.low %v1275, %v1283
        %v1301 = vcombine.high %v1275, %v1283
        %v1303 = vunpack.c.l.s4 1934713408
        %v1304 = vunpack.c.0.s8 %v1303
        %v1305 = vlaneseq
        %v1306 = vshrl.u32 %v1305, 7
        %v1307 = vsub.s32 %v1304, %v1306
        %v1308 = vrot.slane %v1300, %v1307
        %v1310 = vunpack.c.l.s4 1934713408
        %v1311 = vunpack.c.0.s8 %v1310
        %v1312 = vlaneseq
        %v1313 = vshrl.u32 %v1312, 7
        %v1314 = vsub.s32 %v1311, %v1313
        %v1315 = vrot.slane %v1301, %v1314
        %v1316 = vcombine.low %v1292, %v1308
        %v1317 = vcombine.high %v1292, %v1308
        %v1318 = vcombine.low %v1299, %v1315
        %v1319 = vcombine.high %v1299, %v1315
        %vm1320 = vcmask 64512
        %v1322 = vsel %vm1320, %v1020, 0
        %v1325 = vsel %vm1320, %v1168, 0
        %1327 = vmatprep.subr.mxu0 0.0
        %1328 = vmatpush1.xpose.msra.mxu0 %v1325
        %1329 = vmatprep.subr.mxu0 0.0
        %1330 = vmatpush1.xpose.msra.mxu0 0.0
        %1331 = vmatprep.subr.mxu0 0.0
        %1332 = vmatpush1.xpose.msra.mxu0 0.0
        %1333 = vmatprep.subr.mxu0 0.0
        %1334 = vmatpush1.xpose.msra.mxu0 0.0
        %1335 = vmatprep.subr.mxu0 0.0
        %1336 = vmatpush1.xpose.msra.mxu0 0.0
        %1337 = vmatprep.subr.mxu0 0.0
        %1338 = vmatpush1.xpose.msra.mxu0 0.0
        %1339 = vmatprep.subr.mxu0 0.0
        %1340 = vmatpush1.xpose.msra.mxu0 0.0
        %1341 = vmatprep.subr.mxu0 0.0
        %1342 = vmatpush1.xpose.msra.mxu0 0.0
        %1343 = vmatprep.subr.mxu0 0.0
        %1344 = vmatpush1.xpose.msra.mxu0 0.0
        %1345 = vmatprep.subr.mxu0 0.0
        %1346 = vmatpush1.xpose.msra.mxu0 0.0
        %1347 = vmatprep.subr.mxu0 0.0
        %1348 = vmatpush1.xpose.msra.mxu0 0.0
        %1349 = vmatprep.subr.mxu0 0.0
        %1350 = vmatpush1.xpose.msra.mxu0 0.0
        %1351 = vmatprep.subr.mxu0 0.0
        %1352 = vmatpush1.xpose.msra.mxu0 0.0
        %1353 = vmatprep.subr.mxu0 0.0
        %1354 = vmatpush1.xpose.msra.mxu0 0.0
        %1355 = vmatprep.subr.mxu0 0.0
        %1356 = vmatpush1.xpose.msra.mxu0 0.0
        %1357 = vmatprep.subr.mxu0 0.0
        %1358 = vmatpush1.xpose.msra.mxu0 0.0
        %1359 = vmatprep.subr.mxu0 0.0
        %1360 = vmatpush1.xpose.msra.mxu0 0.0
        %1361 = vmatprep.subr.mxu0 0.0
        %1362 = vmatpush1.xpose.msra.mxu0 0.0
        %1363 = vmatprep.subr.mxu0 0.0
        %1364 = vmatpush1.xpose.msra.mxu0 0.0
        %1365 = vmatprep.subr.mxu0 0.0
        %1366 = vmatpush1.xpose.msra.mxu0 0.0
        %1367 = vmatprep.subr.mxu0 0.0
        %1368 = vmatpush1.xpose.msra.mxu0 0.0
        %1369 = vmatprep.subr.mxu0 0.0
        %1370 = vmatpush1.xpose.msra.mxu0 0.0
        %1371 = vmatprep.subr.mxu0 0.0
        %1372 = vmatpush1.xpose.msra.mxu0 0.0
        %1373 = vmatprep.subr.mxu0 0.0
        %1374 = vmatpush1.xpose.msra.mxu0 0.0
        %1375 = vmatprep.subr.mxu0 0.0
        %1376 = vmatpush1.xpose.msra.mxu0 0.0
        %1377 = vmatprep.subr.mxu0 0.0
        %1378 = vmatpush1.xpose.msra.mxu0 0.0
        %1379 = vmatprep.subr.mxu0 0.0
        %1380 = vmatpush1.xpose.msra.mxu0 0.0
        %1381 = vmatprep.subr.mxu0 0.0
        %1382 = vmatpush1.xpose.msra.mxu0 0.0
        %1383 = vmatprep.subr.mxu0 0.0
        %1384 = vmatpush1.xpose.msra.mxu0 0.0
        %1385 = vmatprep.subr.mxu0 0.0
        %1386 = vmatpush1.xpose.msra.mxu0 0.0
        %1387 = vmatprep.subr.mxu0 0.0
        %1388 = vmatpush1.xpose.msra.mxu0 0.0
        %1389 = vmatprep.subr.mxu0 0.0
        %1390 = vmatpush1.xpose.msra.mxu0 0.0
        %1391 = vmatprep.mubr.f32.mxu0 0.0
        %1392 = vmatmul.mubr.f32.gmra.mrb[0].mxu0 %v1322
        %v1393 = vpop.f32.mrb[0].mxu0
        %v1394 = vadd.f32 0.0, %v1393
        %v1395 = vpop.f32.mrb[0].mxu0
        %1396 = vdwg.mxu0
        %v1398 = vsel %vm1320, %v1021, 0
        %v1401 = vsel %vm1320, %v1169, 0
        %1403 = vmatprep.subr.mxu0 0.0
        %1404 = vmatpush1.xpose.msra.mxu0 %v1401
        %1405 = vmatprep.subr.mxu0 0.0
        %1406 = vmatpush1.xpose.msra.mxu0 0.0
        %1407 = vmatprep.subr.mxu0 0.0
        %1408 = vmatpush1.xpose.msra.mxu0 0.0
        %1409 = vmatprep.subr.mxu0 0.0
        %1410 = vmatpush1.xpose.msra.mxu0 0.0
        %1411 = vmatprep.subr.mxu0 0.0
        %1412 = vmatpush1.xpose.msra.mxu0 0.0
        %1413 = vmatprep.subr.mxu0 0.0
        %1414 = vmatpush1.xpose.msra.mxu0 0.0
        %1415 = vmatprep.subr.mxu0 0.0
        %1416 = vmatpush1.xpose.msra.mxu0 0.0
        %1417 = vmatprep.subr.mxu0 0.0
        %1418 = vmatpush1.xpose.msra.mxu0 0.0
        %1419 = vmatprep.subr.mxu0 0.0
        %1420 = vmatpush1.xpose.msra.mxu0 0.0
        %1421 = vmatprep.subr.mxu0 0.0
        %1422 = vmatpush1.xpose.msra.mxu0 0.0
        %1423 = vmatprep.subr.mxu0 0.0
        %1424 = vmatpush1.xpose.msra.mxu0 0.0
        %1425 = vmatprep.subr.mxu0 0.0
        %1426 = vmatpush1.xpose.msra.mxu0 0.0
        %1427 = vmatprep.subr.mxu0 0.0
        %1428 = vmatpush1.xpose.msra.mxu0 0.0
        %1429 = vmatprep.subr.mxu0 0.0
        %1430 = vmatpush1.xpose.msra.mxu0 0.0
        %1431 = vmatprep.subr.mxu0 0.0
        %1432 = vmatpush1.xpose.msra.mxu0 0.0
        %1433 = vmatprep.subr.mxu0 0.0
        %1434 = vmatpush1.xpose.msra.mxu0 0.0
        %1435 = vmatprep.subr.mxu0 0.0
        %1436 = vmatpush1.xpose.msra.mxu0 0.0
        %1437 = vmatprep.subr.mxu0 0.0
        %1438 = vmatpush1.xpose.msra.mxu0 0.0
        %1439 = vmatprep.subr.mxu0 0.0
        %1440 = vmatpush1.xpose.msra.mxu0 0.0
        %1441 = vmatprep.subr.mxu0 0.0
        %1442 = vmatpush1.xpose.msra.mxu0 0.0
        %1443 = vmatprep.subr.mxu0 0.0
        %1444 = vmatpush1.xpose.msra.mxu0 0.0
        %1445 = vmatprep.subr.mxu0 0.0
        %1446 = vmatpush1.xpose.msra.mxu0 0.0
        %1447 = vmatprep.subr.mxu0 0.0
        %1448 = vmatpush1.xpose.msra.mxu0 0.0
        %1449 = vmatprep.subr.mxu0 0.0
        %1450 = vmatpush1.xpose.msra.mxu0 0.0
        %1451 = vmatprep.subr.mxu0 0.0
        %1452 = vmatpush1.xpose.msra.mxu0 0.0
        %1453 = vmatprep.subr.mxu0 0.0
        %1454 = vmatpush1.xpose.msra.mxu0 0.0
        %1455 = vmatprep.subr.mxu0 0.0
        %1456 = vmatpush1.xpose.msra.mxu0 0.0
        %1457 = vmatprep.subr.mxu0 0.0
        %1458 = vmatpush1.xpose.msra.mxu0 0.0
        %1459 = vmatprep.subr.mxu0 0.0
        %1460 = vmatpush1.xpose.msra.mxu0 0.0
        %1461 = vmatprep.subr.mxu0 0.0
        %1462 = vmatpush1.xpose.msra.mxu0 0.0
        %1463 = vmatprep.subr.mxu0 0.0
        %1464 = vmatpush1.xpose.msra.mxu0 0.0
        %1465 = vmatprep.subr.mxu0 0.0
        %1466 = vmatpush1.xpose.msra.mxu0 0.0
        %1467 = vmatprep.mubr.f32.mxu0 0.0
        %1468 = vmatmul.mubr.f32.gmra.mrb[0].mxu0 %v1398
        %v1469 = vpop.f32.mrb[0].mxu0
        %v1470 = vadd.f32 0.0, %v1469
        %v1471 = vpop.f32.mrb[0].mxu0
        %1472 = vdwg.mxu0
        %v1474 = vsel %vm1320, %v1022, 0
        %v1477 = vsel %vm1320, %v1170, 0
        %1479 = vmatprep.subr.mxu0 0.0
        %1480 = vmatpush1.xpose.msra.mxu0 %v1477
        %1481 = vmatprep.subr.mxu0 0.0
        %1482 = vmatpush1.xpose.msra.mxu0 0.0
        %1483 = vmatprep.subr.mxu0 0.0
        %1484 = vmatpush1.xpose.msra.mxu0 0.0
        %1485 = vmatprep.subr.mxu0 0.0
        %1486 = vmatpush1.xpose.msra.mxu0 0.0
        %1487 = vmatprep.subr.mxu0 0.0
        %1488 = vmatpush1.xpose.msra.mxu0 0.0
        %1489 = vmatprep.subr.mxu0 0.0
        %1490 = vmatpush1.xpose.msra.mxu0 0.0
        %1491 = vmatprep.subr.mxu0 0.0
        %1492 = vmatpush1.xpose.msra.mxu0 0.0
        %1493 = vmatprep.subr.mxu0 0.0
        %1494 = vmatpush1.xpose.msra.mxu0 0.0
        %1495 = vmatprep.subr.mxu0 0.0
        %1496 = vmatpush1.xpose.msra.mxu0 0.0
        %1497 = vmatprep.subr.mxu0 0.0
        %1498 = vmatpush1.xpose.msra.mxu0 0.0
        %1499 = vmatprep.subr.mxu0 0.0
        %1500 = vmatpush1.xpose.msra.mxu0 0.0
        %1501 = vmatprep.subr.mxu0 0.0
        %1502 = vmatpush1.xpose.msra.mxu0 0.0
        %1503 = vmatprep.subr.mxu0 0.0
        %1504 = vmatpush1.xpose.msra.mxu0 0.0
        %1505 = vmatprep.subr.mxu0 0.0
        %1506 = vmatpush1.xpose.msra.mxu0 0.0
        %1507 = vmatprep.subr.mxu0 0.0
        %1508 = vmatpush1.xpose.msra.mxu0 0.0
        %1509 = vmatprep.subr.mxu0 0.0
        %1510 = vmatpush1.xpose.msra.mxu0 0.0
        %1511 = vmatprep.subr.mxu0 0.0
        %1512 = vmatpush1.xpose.msra.mxu0 0.0
        %1513 = vmatprep.subr.mxu0 0.0
        %1514 = vmatpush1.xpose.msra.mxu0 0.0
        %1515 = vmatprep.subr.mxu0 0.0
        %1516 = vmatpush1.xpose.msra.mxu0 0.0
        %1517 = vmatprep.subr.mxu0 0.0
        %1518 = vmatpush1.xpose.msra.mxu0 0.0
        %1519 = vmatprep.subr.mxu0 0.0
        %1520 = vmatpush1.xpose.msra.mxu0 0.0
        %1521 = vmatprep.subr.mxu0 0.0
        %1522 = vmatpush1.xpose.msra.mxu0 0.0
        %1523 = vmatprep.subr.mxu0 0.0
        %1524 = vmatpush1.xpose.msra.mxu0 0.0
        %1525 = vmatprep.subr.mxu0 0.0
        %1526 = vmatpush1.xpose.msra.mxu0 0.0
        %1527 = vmatprep.subr.mxu0 0.0
        %1528 = vmatpush1.xpose.msra.mxu0 0.0
        %1529 = vmatprep.subr.mxu0 0.0
        %1530 = vmatpush1.xpose.msra.mxu0 0.0
        %1531 = vmatprep.subr.mxu0 0.0
        %1532 = vmatpush1.xpose.msra.mxu0 0.0
        %1533 = vmatprep.subr.mxu0 0.0
        %1534 = vmatpush1.xpose.msra.mxu0 0.0
        %1535 = vmatprep.subr.mxu0 0.0
        %1536 = vmatpush1.xpose.msra.mxu0 0.0
        %1537 = vmatprep.subr.mxu0 0.0
        %1538 = vmatpush1.xpose.msra.mxu0 0.0
        %1539 = vmatprep.subr.mxu0 0.0
        %1540 = vmatpush1.xpose.msra.mxu0 0.0
        %1541 = vmatprep.subr.mxu0 0.0
        %1542 = vmatpush1.xpose.msra.mxu0 0.0
        %1543 = vmatprep.mubr.f32.mxu0 0.0
        %1544 = vmatmul.mubr.f32.gmra.mrb[0].mxu0 %v1474
        %v1545 = vpop.f32.mrb[0].mxu0
        %v1546 = vadd.f32 0.0, %v1545
        %v1547 = vpop.f32.mrb[0].mxu0
        %1548 = vdwg.mxu0
        %v1550 = vsel %vm1320, %v1023, 0
        %v1553 = vsel %vm1320, %v1171, 0
        %1555 = vmatprep.subr.mxu0 0.0
        %1556 = vmatpush1.xpose.msra.mxu0 %v1553
        %1557 = vmatprep.subr.mxu0 0.0
        %1558 = vmatpush1.xpose.msra.mxu0 0.0
        %1559 = vmatprep.subr.mxu0 0.0
        %1560 = vmatpush1.xpose.msra.mxu0 0.0
        %1561 = vmatprep.subr.mxu0 0.0
        %1562 = vmatpush1.xpose.msra.mxu0 0.0
        %1563 = vmatprep.subr.mxu0 0.0
        %1564 = vmatpush1.xpose.msra.mxu0 0.0
        %1565 = vmatprep.subr.mxu0 0.0
        %1566 = vmatpush1.xpose.msra.mxu0 0.0
        %1567 = vmatprep.subr.mxu0 0.0
        %1568 = vmatpush1.xpose.msra.mxu0 0.0
        %1569 = vmatprep.subr.mxu0 0.0
        %1570 = vmatpush1.xpose.msra.mxu0 0.0
        %1571 = vmatprep.subr.mxu0 0.0
        %1572 = vmatpush1.xpose.msra.mxu0 0.0
        %1573 = vmatprep.subr.mxu0 0.0
        %1574 = vmatpush1.xpose.msra.mxu0 0.0
        %1575 = vmatprep.subr.mxu0 0.0
        %1576 = vmatpush1.xpose.msra.mxu0 0.0
        %1577 = vmatprep.subr.mxu0 0.0
        %1578 = vmatpush1.xpose.msra.mxu0 0.0
        %1579 = vmatprep.subr.mxu0 0.0
        %1580 = vmatpush1.xpose.msra.mxu0 0.0
        %1581 = vmatprep.subr.mxu0 0.0
        %1582 = vmatpush1.xpose.msra.mxu0 0.0
        %1583 = vmatprep.subr.mxu0 0.0
        %1584 = vmatpush1.xpose.msra.mxu0 0.0
        %1585 = vmatprep.subr.mxu0 0.0
        %1586 = vmatpush1.xpose.msra.mxu0 0.0
        %1587 = vmatprep.subr.mxu0 0.0
        %1588 = vmatpush1.xpose.msra.mxu0 0.0
        %1589 = vmatprep.subr.mxu0 0.0
        %1590 = vmatpush1.xpose.msra.mxu0 0.0
        %1591 = vmatprep.subr.mxu0 0.0
        %1592 = vmatpush1.xpose.msra.mxu0 0.0
        %1593 = vmatprep.subr.mxu0 0.0
        %1594 = vmatpush1.xpose.msra.mxu0 0.0
        %1595 = vmatprep.subr.mxu0 0.0
        %1596 = vmatpush1.xpose.msra.mxu0 0.0
        %1597 = vmatprep.subr.mxu0 0.0
        %1598 = vmatpush1.xpose.msra.mxu0 0.0
        %1599 = vmatprep.subr.mxu0 0.0
        %1600 = vmatpush1.xpose.msra.mxu0 0.0
        %1601 = vmatprep.subr.mxu0 0.0
        %1602 = vmatpush1.xpose.msra.mxu0 0.0
        %1603 = vmatprep.subr.mxu0 0.0
        %1604 = vmatpush1.xpose.msra.mxu0 0.0
        %1605 = vmatprep.subr.mxu0 0.0
        %1606 = vmatpush1.xpose.msra.mxu0 0.0
        %1607 = vmatprep.subr.mxu0 0.0
        %1608 = vmatpush1.xpose.msra.mxu0 0.0
        %1609 = vmatprep.subr.mxu0 0.0
        %1610 = vmatpush1.xpose.msra.mxu0 0.0
        %1611 = vmatprep.subr.mxu0 0.0
        %1612 = vmatpush1.xpose.msra.mxu0 0.0
        %1613 = vmatprep.subr.mxu0 0.0
        %1614 = vmatpush1.xpose.msra.mxu0 0.0
        %1615 = vmatprep.subr.mxu0 0.0
        %1616 = vmatpush1.xpose.msra.mxu0 0.0
        %1617 = vmatprep.subr.mxu0 0.0
        %1618 = vmatpush1.xpose.msra.mxu0 0.0
        %1619 = vmatprep.mubr.f32.mxu0 0.0
        %1620 = vmatmul.mubr.f32.gmra.mrb[0].mxu0 %v1550
        %v1621 = vpop.f32.mrb[0].mxu0
        %v1622 = vadd.f32 0.0, %v1621
        %v1623 = vpop.f32.mrb[0].mxu0
        %1624 = vdwg.mxu0
        %v1625 = vld [vmem:[%s710] sm:$0x1]
        %vm1626 = vcmp.gt.f32.partialorder %v1625, 0.0
        %v1627 = vsel %vm1626, 1, 0
        %v1628 = vlaneseq
        %v1629 = vshrl.u32 %v1628, 7
        %v1630 = vsub.s32 0, %v1629
        %v1631 = vrot.slane %v1627, %v1630
        %vm1632 = vcmp.eq.s32.totalorder %v1631, 1
        %v1633 = vsel %vm1632, %v1394, -1e+09
        %v1634 = vsel %vm1632, %v1470, -1e+09
        %v1635 = vsel %vm1632, %v1546, -1e+09
        %v1636 = vsel %vm1632, %v1622, -1e+09
        %v1637 = vsel %vm1320, %v1633, -inf
        %1638 = vmax.xlane.f32.xlu0 %v1637
        %v1639 = vpop.xlane.xlu0 %1638
        %v1640 = vsel %vm1320, %v1634, -inf
        %1641 = vmax.xlane.f32.xlu0 %v1640
        %v1642 = vpop.xlane.xlu0 %1641
        %v1643 = vsel %vm1320, %v1635, -inf
        %1644 = vmax.xlane.f32.xlu0 %v1643
        %v1645 = vpop.xlane.xlu0 %1644
        %v1646 = vsel %vm1320, %v1636, -inf
        %1647 = vmax.xlane.f32.xlu0 %v1646
        %v1648 = vpop.xlane.xlu0 %1647
        %v1649 = vsub.f32 %v1633, %v1639
        %v1650 = vsub.f32 %v1634, %v1642
        %v1651 = vsub.f32 %v1635, %v1645
        %v1652 = vsub.f32 %v1636, %v1648
        %v1653 = vmul.f32 %v1649, 1.442695
        %v1654 = vpow.pop %v1653
        %v1655 = vmul.f32 %v1650, 1.442695
        %v1656 = vpow.pop %v1655
        %v1657 = vmul.f32 %v1651, 1.442695
        %v1658 = vpow.pop %v1657
        %v1659 = vmul.f32 %v1652, 1.442695
        %v1660 = vpow.pop %v1659
        %v1661 = vsel %vm1320, %v1654, 0.0
        %1662 = vadd.xlane.f32.xlu0 %v1661
        %v1663 = vpop.xlane.xlu0 %1662
        %v1664 = vsel %vm1320, %v1656, 0.0
        %1665 = vadd.xlane.f32.xlu0 %v1664
        %v1666 = vpop.xlane.xlu0 %1665
        %v1667 = vsel %vm1320, %v1658, 0.0
        %1668 = vadd.xlane.f32.xlu0 %v1667
        %v1669 = vpop.xlane.xlu0 %1668
        %v1670 = vsel %vm1320, %v1660, 0.0
        %1671 = vadd.xlane.f32.xlu0 %v1670
        %v1672 = vpop.xlane.xlu0 %1671
        %v1673 = vrcp.pop %v1663
        %v1674 = vrcp.pop %v1666
        %v1675 = vrcp.pop %v1669
        %v1676 = vrcp.pop %v1672
        %v1677 = vmul.f32 %v1654, %v1673
        %v1678 = vmul.f32 %v1656, %v1674
        %v1679 = vmul.f32 %v1658, %v1675
        %v1680 = vmul.f32 %v1660, %v1676
        %v1682 = vsel %vm1320, %v1677, 0
        %1684 = vmatprep.subr.mxu0 0.0
        %1685 = vmatpush1.msra.mxu0 %v1316
        %1686 = vmatprep.subr.mxu0 0.0
        %1687 = vmatpush1.msra.mxu0 0.0
        %1688 = vmatprep.subr.mxu0 0.0
        %1689 = vmatpush1.msra.mxu0 0.0
        %1690 = vmatprep.subr.mxu0 0.0
        %1691 = vmatpush1.msra.mxu0 0.0
        %1692 = vmatprep.subr.mxu0 0.0
        %1693 = vmatpush1.msra.mxu0 0.0
        %1694 = vmatprep.subr.mxu0 0.0
        %1695 = vmatpush1.msra.mxu0 0.0
        %1696 = vmatprep.subr.mxu0 0.0
        %1697 = vmatpush1.msra.mxu0 0.0
        %1698 = vmatprep.subr.mxu0 0.0
        %1699 = vmatpush1.msra.mxu0 0.0
        %1700 = vmatprep.subr.mxu0 0.0
        %1701 = vmatpush1.msra.mxu0 0.0
        %1702 = vmatprep.subr.mxu0 0.0
        %1703 = vmatpush1.msra.mxu0 0.0
        %1704 = vmatprep.subr.mxu0 0.0
        %1705 = vmatpush1.msra.mxu0 0.0
        %1706 = vmatprep.subr.mxu0 0.0
        %1707 = vmatpush1.msra.mxu0 0.0
        %1708 = vmatprep.subr.mxu0 0.0
        %1709 = vmatpush1.msra.mxu0 0.0
        %1710 = vmatprep.subr.mxu0 0.0
        %1711 = vmatpush1.msra.mxu0 0.0
        %1712 = vmatprep.subr.mxu0 0.0
        %1713 = vmatpush1.msra.mxu0 0.0
        %1714 = vmatprep.subr.mxu0 0.0
        %1715 = vmatpush1.msra.mxu0 0.0
        %1716 = vmatprep.subr.mxu0 0.0
        %1717 = vmatpush1.msra.mxu0 0.0
        %1718 = vmatprep.subr.mxu0 0.0
        %1719 = vmatpush1.msra.mxu0 0.0
        %1720 = vmatprep.subr.mxu0 0.0
        %1721 = vmatpush1.msra.mxu0 0.0
        %1722 = vmatprep.subr.mxu0 0.0
        %1723 = vmatpush1.msra.mxu0 0.0
        %1724 = vmatprep.subr.mxu0 0.0
        %1725 = vmatpush1.msra.mxu0 0.0
        %1726 = vmatprep.subr.mxu0 0.0
        %1727 = vmatpush1.msra.mxu0 0.0
        %1728 = vmatprep.subr.mxu0 0.0
        %1729 = vmatpush1.msra.mxu0 0.0
        %1730 = vmatprep.subr.mxu0 0.0
        %1731 = vmatpush1.msra.mxu0 0.0
        %1732 = vmatprep.subr.mxu0 0.0
        %1733 = vmatpush1.msra.mxu0 0.0
        %1734 = vmatprep.subr.mxu0 0.0
        %1735 = vmatpush1.msra.mxu0 0.0
        %1736 = vmatprep.subr.mxu0 0.0
        %1737 = vmatpush1.msra.mxu0 0.0
        %1738 = vmatprep.subr.mxu0 0.0
        %1739 = vmatpush1.msra.mxu0 0.0
        %1740 = vmatprep.subr.mxu0 0.0
        %1741 = vmatpush1.msra.mxu0 0.0
        %1742 = vmatprep.subr.mxu0 0.0
        %1743 = vmatpush1.msra.mxu0 0.0
        %1744 = vmatprep.subr.mxu0 0.0
        %1745 = vmatpush1.msra.mxu0 0.0
        %1746 = vmatprep.subr.mxu0 0.0
        %1747 = vmatpush1.msra.mxu0 0.0
        %1748 = vmatprep.mubr.f32.mxu0 0.0
        %1749 = vmatmul.mubr.f32.gmra.mrb[0].mxu0 %v1682
        %v1750 = vpop.f32.mrb[0].mxu0
        %v1751 = vadd.f32 0.0, %v1750
        %v1752 = vpop.f32.mrb[0].mxu0
        %1753 = vdwg.mxu0
        %v1755 = vsel %vm1320, %v1678, 0
        %1757 = vmatprep.subr.mxu0 0.0
        %1758 = vmatpush1.msra.mxu0 %v1317
        %1759 = vmatprep.subr.mxu0 0.0
        %1760 = vmatpush1.msra.mxu0 0.0
        %1761 = vmatprep.subr.mxu0 0.0
        %1762 = vmatpush1.msra.mxu0 0.0
        %1763 = vmatprep.subr.mxu0 0.0
        %1764 = vmatpush1.msra.mxu0 0.0
        %1765 = vmatprep.subr.mxu0 0.0
        %1766 = vmatpush1.msra.mxu0 0.0
        %1767 = vmatprep.subr.mxu0 0.0
        %1768 = vmatpush1.msra.mxu0 0.0
        %1769 = vmatprep.subr.mxu0 0.0
        %1770 = vmatpush1.msra.mxu0 0.0
        %1771 = vmatprep.subr.mxu0 0.0
        %1772 = vmatpush1.msra.mxu0 0.0
        %1773 = vmatprep.subr.mxu0 0.0
        %1774 = vmatpush1.msra.mxu0 0.0
        %1775 = vmatprep.subr.mxu0 0.0
        %1776 = vmatpush1.msra.mxu0 0.0
        %1777 = vmatprep.subr.mxu0 0.0
        %1778 = vmatpush1.msra.mxu0 0.0
        %1779 = vmatprep.subr.mxu0 0.0
        %1780 = vmatpush1.msra.mxu0 0.0
        %1781 = vmatprep.subr.mxu0 0.0
        %1782 = vmatpush1.msra.mxu0 0.0
        %1783 = vmatprep.subr.mxu0 0.0
        %1784 = vmatpush1.msra.mxu0 0.0
        %1785 = vmatprep.subr.mxu0 0.0
        %1786 = vmatpush1.msra.mxu0 0.0
        %1787 = vmatprep.subr.mxu0 0.0
        %1788 = vmatpush1.msra.mxu0 0.0
        %1789 = vmatprep.subr.mxu0 0.0
        %1790 = vmatpush1.msra.mxu0 0.0
        %1791 = vmatprep.subr.mxu0 0.0
        %1792 = vmatpush1.msra.mxu0 0.0
        %1793 = vmatprep.subr.mxu0 0.0
        %1794 = vmatpush1.msra.mxu0 0.0
        %1795 = vmatprep.subr.mxu0 0.0
        %1796 = vmatpush1.msra.mxu0 0.0
        %1797 = vmatprep.subr.mxu0 0.0
        %1798 = vmatpush1.msra.mxu0 0.0
        %1799 = vmatprep.subr.mxu0 0.0
        %1800 = vmatpush1.msra.mxu0 0.0
        %1801 = vmatprep.subr.mxu0 0.0
        %1802 = vmatpush1.msra.mxu0 0.0
        %1803 = vmatprep.subr.mxu0 0.0
        %1804 = vmatpush1.msra.mxu0 0.0
        %1805 = vmatprep.subr.mxu0 0.0
        %1806 = vmatpush1.msra.mxu0 0.0
        %1807 = vmatprep.subr.mxu0 0.0
        %1808 = vmatpush1.msra.mxu0 0.0
        %1809 = vmatprep.subr.mxu0 0.0
        %1810 = vmatpush1.msra.mxu0 0.0
        %1811 = vmatprep.subr.mxu0 0.0
        %1812 = vmatpush1.msra.mxu0 0.0
        %1813 = vmatprep.subr.mxu0 0.0
        %1814 = vmatpush1.msra.mxu0 0.0
        %1815 = vmatprep.subr.mxu0 0.0
        %1816 = vmatpush1.msra.mxu0 0.0
        %1817 = vmatprep.subr.mxu0 0.0
        %1818 = vmatpush1.msra.mxu0 0.0
        %1819 = vmatprep.subr.mxu0 0.0
        %1820 = vmatpush1.msra.mxu0 0.0
        %1821 = vmatprep.mubr.f32.mxu0 0.0
        %1822 = vmatmul.mubr.f32.gmra.mrb[0].mxu0 %v1755
        %v1823 = vpop.f32.mrb[0].mxu0
        %v1824 = vadd.f32 0.0, %v1823
        %v1825 = vpop.f32.mrb[0].mxu0
        %1826 = vdwg.mxu0
        %v1828 = vsel %vm1320, %v1679, 0
        %1830 = vmatprep.subr.mxu0 0.0
        %1831 = vmatpush1.msra.mxu0 %v1318
        %1832 = vmatprep.subr.mxu0 0.0
        %1833 = vmatpush1.msra.mxu0 0.0
        %1834 = vmatprep.subr.mxu0 0.0
        %1835 = vmatpush1.msra.mxu0 0.0
        %1836 = vmatprep.subr.mxu0 0.0
        %1837 = vmatpush1.msra.mxu0 0.0
        %1838 = vmatprep.subr.mxu0 0.0
        %1839 = vmatpush1.msra.mxu0 0.0
        %1840 = vmatprep.subr.mxu0 0.0
        %1841 = vmatpush1.msra.mxu0 0.0
        %1842 = vmatprep.subr.mxu0 0.0
        %1843 = vmatpush1.msra.mxu0 0.0
        %1844 = vmatprep.subr.mxu0 0.0
        %1845 = vmatpush1.msra.mxu0 0.0
        %1846 = vmatprep.subr.mxu0 0.0
        %1847 = vmatpush1.msra.mxu0 0.0
        %1848 = vmatprep.subr.mxu0 0.0
        %1849 = vmatpush1.msra.mxu0 0.0
        %1850 = vmatprep.subr.mxu0 0.0
        %1851 = vmatpush1.msra.mxu0 0.0
        %1852 = vmatprep.subr.mxu0 0.0
        %1853 = vmatpush1.msra.mxu0 0.0
        %1854 = vmatprep.subr.mxu0 0.0
        %1855 = vmatpush1.msra.mxu0 0.0
        %1856 = vmatprep.subr.mxu0 0.0
        %1857 = vmatpush1.msra.mxu0 0.0
        %1858 = vmatprep.subr.mxu0 0.0
        %1859 = vmatpush1.msra.mxu0 0.0
        %1860 = vmatprep.subr.mxu0 0.0
        %1861 = vmatpush1.msra.mxu0 0.0
        %1862 = vmatprep.subr.mxu0 0.0
        %1863 = vmatpush1.msra.mxu0 0.0
        %1864 = vmatprep.subr.mxu0 0.0
        %1865 = vmatpush1.msra.mxu0 0.0
        %1866 = vmatprep.subr.mxu0 0.0
        %1867 = vmatpush1.msra.mxu0 0.0
        %1868 = vmatprep.subr.mxu0 0.0
        %1869 = vmatpush1.msra.mxu0 0.0
        %1870 = vmatprep.subr.mxu0 0.0
        %1871 = vmatpush1.msra.mxu0 0.0
        %1872 = vmatprep.subr.mxu0 0.0
        %1873 = vmatpush1.msra.mxu0 0.0
        %1874 = vmatprep.subr.mxu0 0.0
        %1875 = vmatpush1.msra.mxu0 0.0
        %1876 = vmatprep.subr.mxu0 0.0
        %1877 = vmatpush1.msra.mxu0 0.0
        %1878 = vmatprep.subr.mxu0 0.0
        %1879 = vmatpush1.msra.mxu0 0.0
        %1880 = vmatprep.subr.mxu0 0.0
        %1881 = vmatpush1.msra.mxu0 0.0
        %1882 = vmatprep.subr.mxu0 0.0
        %1883 = vmatpush1.msra.mxu0 0.0
        %1884 = vmatprep.subr.mxu0 0.0
        %1885 = vmatpush1.msra.mxu0 0.0
        %1886 = vmatprep.subr.mxu0 0.0
        %1887 = vmatpush1.msra.mxu0 0.0
        %1888 = vmatprep.subr.mxu0 0.0
        %1889 = vmatpush1.msra.mxu0 0.0
        %1890 = vmatprep.subr.mxu0 0.0
        %1891 = vmatpush1.msra.mxu0 0.0
        %1892 = vmatprep.subr.mxu0 0.0
        %1893 = vmatpush1.msra.mxu0 0.0
        %1894 = vmatprep.mubr.f32.mxu0 0.0
        %1895 = vmatmul.mubr.f32.gmra.mrb[0].mxu0 %v1828
        %v1896 = vpop.f32.mrb[0].mxu0
        %v1897 = vadd.f32 0.0, %v1896
        %v1898 = vpop.f32.mrb[0].mxu0
        %1899 = vdwg.mxu0
        %v1901 = vsel %vm1320, %v1680, 0
        %1903 = vmatprep.subr.mxu0 0.0
        %1904 = vmatpush1.msra.mxu0 %v1319
        %1905 = vmatprep.subr.mxu0 0.0
        %1906 = vmatpush1.msra.mxu0 0.0
        %1907 = vmatprep.subr.mxu0 0.0
        %1908 = vmatpush1.msra.mxu0 0.0
        %1909 = vmatprep.subr.mxu0 0.0
        %1910 = vmatpush1.msra.mxu0 0.0
        %1911 = vmatprep.subr.mxu0 0.0
        %1912 = vmatpush1.msra.mxu0 0.0
        %1913 = vmatprep.subr.mxu0 0.0
        %1914 = vmatpush1.msra.mxu0 0.0
        %1915 = vmatprep.subr.mxu0 0.0
        %1916 = vmatpush1.msra.mxu0 0.0
        %1917 = vmatprep.subr.mxu0 0.0
        %1918 = vmatpush1.msra.mxu0 0.0
        %1919 = vmatprep.subr.mxu0 0.0
        %1920 = vmatpush1.msra.mxu0 0.0
        %1921 = vmatprep.subr.mxu0 0.0
        %1922 = vmatpush1.msra.mxu0 0.0
        %1923 = vmatprep.subr.mxu0 0.0
        %1924 = vmatpush1.msra.mxu0 0.0
        %1925 = vmatprep.subr.mxu0 0.0
        %1926 = vmatpush1.msra.mxu0 0.0
        %1927 = vmatprep.subr.mxu0 0.0
        %1928 = vmatpush1.msra.mxu0 0.0
        %1929 = vmatprep.subr.mxu0 0.0
        %1930 = vmatpush1.msra.mxu0 0.0
        %1931 = vmatprep.subr.mxu0 0.0
        %1932 = vmatpush1.msra.mxu0 0.0
        %1933 = vmatprep.subr.mxu0 0.0
        %1934 = vmatpush1.msra.mxu0 0.0
        %1935 = vmatprep.subr.mxu0 0.0
        %1936 = vmatpush1.msra.mxu0 0.0
        %1937 = vmatprep.subr.mxu0 0.0
        %1938 = vmatpush1.msra.mxu0 0.0
        %1939 = vmatprep.subr.mxu0 0.0
        %1940 = vmatpush1.msra.mxu0 0.0
        %1941 = vmatprep.subr.mxu0 0.0
        %1942 = vmatpush1.msra.mxu0 0.0
        %1943 = vmatprep.subr.mxu0 0.0
        %1944 = vmatpush1.msra.mxu0 0.0
        %1945 = vmatprep.subr.mxu0 0.0
        %1946 = vmatpush1.msra.mxu0 0.0
        %1947 = vmatprep.subr.mxu0 0.0
        %1948 = vmatpush1.msra.mxu0 0.0
        %1949 = vmatprep.subr.mxu0 0.0
        %1950 = vmatpush1.msra.mxu0 0.0
        %1951 = vmatprep.subr.mxu0 0.0
        %1952 = vmatpush1.msra.mxu0 0.0
        %1953 = vmatprep.subr.mxu0 0.0
        %1954 = vmatpush1.msra.mxu0 0.0
        %1955 = vmatprep.subr.mxu0 0.0
        %1956 = vmatpush1.msra.mxu0 0.0
        %1957 = vmatprep.subr.mxu0 0.0
        %1958 = vmatpush1.msra.mxu0 0.0
        %1959 = vmatprep.subr.mxu0 0.0
        %1960 = vmatpush1.msra.mxu0 0.0
        %1961 = vmatprep.subr.mxu0 0.0
        %1962 = vmatpush1.msra.mxu0 0.0
        %1963 = vmatprep.subr.mxu0 0.0
        %1964 = vmatpush1.msra.mxu0 0.0
        %1965 = vmatprep.subr.mxu0 0.0
        %1966 = vmatpush1.msra.mxu0 0.0
        %1967 = vmatprep.mubr.f32.mxu0 0.0
        %1968 = vmatmul.mubr.f32.gmra.mrb[0].mxu0 %v1901
        %v1969 = vpop.f32.mrb[0].mxu0
        %v1970 = vadd.f32 0.0, %v1969
        %v1971 = vpop.f32.mrb[0].mxu0
        %1972 = vdwg.mxu0
        %v1973 = vcombine.low %v1751, %v1897
        %v1974 = vcombine.high %v1751, %v1897
        %v1976 = vunpack.c.l.s4 1983009808
        %v1977 = vunpack.c.0.s8 %v1976
        %v1978 = vlaneseq
        %v1979 = vshrl.u32 %v1978, 7
        %v1980 = vsub.s32 %v1977, %v1979
        %v1981 = vrot.slane %v1973, %v1980
        %v1983 = vunpack.c.l.s4 1983009808
        %v1984 = vunpack.c.0.s8 %v1983
        %v1985 = vlaneseq
        %v1986 = vshrl.u32 %v1985, 7
        %v1987 = vsub.s32 %v1984, %v1986
        %v1988 = vrot.slane %v1974, %v1987
        %v1989 = vcombine.low %v1824, %v1970
        %v1990 = vcombine.high %v1824, %v1970
        %v1992 = vunpack.c.l.s4 1983009808
        %v1993 = vunpack.c.0.s8 %v1992
        %v1994 = vlaneseq
        %v1995 = vshrl.u32 %v1994, 7
        %v1996 = vsub.s32 %v1993, %v1995
        %v1997 = vrot.slane %v1989, %v1996
        %v1999 = vunpack.c.l.s4 1983009808
        %v2000 = vunpack.c.0.s8 %v1999
        %v2001 = vlaneseq
        %v2002 = vshrl.u32 %v2001, 7
        %v2003 = vsub.s32 %v2000, %v2002
        %v2004 = vrot.slane %v1990, %v2003
        %v2005 = vcombine.low %v1981, %v1997
        %v2006 = vcombine.high %v1981, %v1997
        %v2008 = vunpack.c.l.s4 1934713408
        %v2009 = vunpack.c.0.s8 %v2008
        %v2010 = vlaneseq
        %v2011 = vshrl.u32 %v2010, 7
        %v2012 = vsub.s32 %v2009, %v2011
        %v2013 = vrot.slane %v2005, %v2012
        %v2015 = vunpack.c.l.s4 1934713408
        %v2016 = vunpack.c.0.s8 %v2015
        %v2017 = vlaneseq
        %v2018 = vshrl.u32 %v2017, 7
        %v2019 = vsub.s32 %v2016, %v2018
        %v2020 = vrot.slane %v2006, %v2019
        %v2021 = vcombine.low %v1988, %v2004
        %v2022 = vcombine.high %v1988, %v2004
        %v2024 = vunpack.c.l.s4 1934713408
        %v2025 = vunpack.c.0.s8 %v2024
        %v2026 = vlaneseq
        %v2027 = vshrl.u32 %v2026, 7
        %v2028 = vsub.s32 %v2025, %v2027
        %v2029 = vrot.slane %v2021, %v2028
        %v2031 = vunpack.c.l.s4 1934713408
        %v2032 = vunpack.c.0.s8 %v2031
        %v2033 = vlaneseq
        %v2034 = vshrl.u32 %v2033, 7
        %v2035 = vsub.s32 %v2032, %v2034
        %v2036 = vrot.slane %v2022, %v2035
        %v2037 = vcombine.high %v2013, 0.0
        %v2038 = vcombine.high %v2020, 0.0
        %v2039 = vcombine.high %v2029, 0.0
        %v2040 = vcombine.high %v2036, 0.0
        %v2041 = vcombine.low %v2013, %v2020
        %v2043 = vunpack.c.l.s4 1983009808
        %v2044 = vunpack.c.0.s8 %v2043
        %v2045 = vlaneseq
        %v2046 = vshrl.u32 %v2045, 7
        %v2047 = vsub.s32 %v2044, %v2046
        %v2048 = vrot.slane %v2041, %v2047
        %v2049 = vcombine.low %v2037, %v2038
        %v2051 = vunpack.c.l.s4 1983009808
        %v2052 = vunpack.c.0.s8 %v2051
        %v2053 = vlaneseq
        %v2054 = vshrl.u32 %v2053, 7
        %v2055 = vsub.s32 %v2052, %v2054
        %v2056 = vrot.slane %v2049, %v2055
        %v2057 = vcombine.low %v2029, %v2036
        %v2059 = vunpack.c.l.s4 1983009808
        %v2060 = vunpack.c.0.s8 %v2059
        %v2061 = vlaneseq
        %v2062 = vshrl.u32 %v2061, 7
        %v2063 = vsub.s32 %v2060, %v2062
        %v2064 = vrot.slane %v2057, %v2063
        %v2065 = vcombine.low %v2039, %v2040
        %v2067 = vunpack.c.l.s4 1983009808
        %v2068 = vunpack.c.0.s8 %v2067
        %v2069 = vlaneseq
        %v2070 = vshrl.u32 %v2069, 7
        %v2071 = vsub.s32 %v2068, %v2070
        %v2072 = vrot.slane %v2065, %v2071
        %v2073 = vcombine.low %v2048, %v2056
        %v2074 = vcombine.high %v2048, %v2056
        %v2076 = vunpack.c.l.s4 1934713408
        %v2077 = vunpack.c.0.s8 %v2076
        %v2078 = vlaneseq
        %v2079 = vshrl.u32 %v2078, 7
        %v2080 = vsub.s32 %v2077, %v2079
        %v2081 = vrot.slane %v2073, %v2080
        %v2083 = vunpack.c.l.s4 1934713408
        %v2084 = vunpack.c.0.s8 %v2083
        %v2085 = vlaneseq
        %v2086 = vshrl.u32 %v2085, 7
        %v2087 = vsub.s32 %v2084, %v2086
        %v2088 = vrot.slane %v2074, %v2087
        %v2089 = vcombine.low %v2064, %v2072
        %v2090 = vcombine.high %v2064, %v2072
        %v2092 = vunpack.c.l.s4 1934713408
        %v2093 = vunpack.c.0.s8 %v2092
        %v2094 = vlaneseq
        %v2095 = vshrl.u32 %v2094, 7
        %v2096 = vsub.s32 %v2093, %v2095
        %v2097 = vrot.slane %v2089, %v2096
        %v2099 = vunpack.c.l.s4 1934713408
        %v2100 = vunpack.c.0.s8 %v2099
        %v2101 = vlaneseq
        %v2102 = vshrl.u32 %v2101, 7
        %v2103 = vsub.s32 %v2100, %v2102
        %v2104 = vrot.slane %v2090, %v2103
        %v2105 = vcombine.low %v2081, %v2097
        %v2106 = vcombine.high %v2081, %v2097
        %v2107 = vcombine.low %v2088, %v2104
        %v2108 = vcombine.high %v2088, %v2104
        %2110 = vrot.lane.b32.xlu0 %v2106, 8
        %v2111 = vpop.permute.xlu0 %2110
        %2114 = vrot.lane.b32.xlu0 %v2107, 16
        %v2115 = vpop.permute.xlu0 %2114
        %2118 = vrot.lane.b32.xlu0 %v2108, 24
        %v2119 = vpop.permute.xlu0 %2118
        %v2121 = vsel %vm1320, %v2105, %v2111
        %vm2122 = vcmask 130048
        %v2123 = vsel %vm2122, %v2121, %v2115
        %vm2124 = vcmask 195584
        %v2125 = vsel %vm2124, %v2123, %v2119
        %v2126 = vld [vmem:[%s729] sm:$0xff]
        %v2127 = vld [vmem:[%s729 + $0x8] sm:$0xff]
        %v2128 = vld [vmem:[%s729 + $0x10] sm:$0xff]
        %v2129 = vld [vmem:[%s729 + $0x18] sm:$0xff]
        %v2130 = vld [vmem:[%s732] sm:$0x1]
        %v2132 = vlaneseq
        %v2133 = vshrl.u32 %v2132, 7
        %v2134 = vsub.s32 0, %v2133
        %v2135 = vrot.slane %v2130, %v2134
        %v2138 = vsel %vm765, %v2125, 0
        %2140 = vmatprep.subr.mxu0 0.0
        %2141 = vmatpush1.msra.mxu0 %v2126
        %2142 = vmatprep.subr.mxu0 0.0
        %2143 = vmatpush1.msra.mxu0 %v2127
        %2144 = vmatprep.subr.mxu0 0.0
        %2145 = vmatpush1.msra.mxu0 %v2128
        %2146 = vmatprep.subr.mxu0 0.0
        %2147 = vmatpush1.msra.mxu0 %v2129
        %2148 = vmatprep.subr.mxu0 0.0
        %2149 = vmatpush1.msra.mxu0 0.0
        %2150 = vmatprep.subr.mxu0 0.0
        %2151 = vmatpush1.msra.mxu0 0.0
        %2152 = vmatprep.subr.mxu0 0.0
        %2153 = vmatpush1.msra.mxu0 0.0
        %2154 = vmatprep.subr.mxu0 0.0
        %2155 = vmatpush1.msra.mxu0 0.0
        %2156 = vmatprep.subr.mxu0 0.0
        %2157 = vmatpush1.msra.mxu0 0.0
        %2158 = vmatprep.subr.mxu0 0.0
        %2159 = vmatpush1.msra.mxu0 0.0
        %2160 = vmatprep.subr.mxu0 0.0
        %2161 = vmatpush1.msra.mxu0 0.0
        %2162 = vmatprep.subr.mxu0 0.0
        %2163 = vmatpush1.msra.mxu0 0.0
        %2164 = vmatprep.subr.mxu0 0.0
        %2165 = vmatpush1.msra.mxu0 0.0
        %2166 = vmatprep.subr.mxu0 0.0
        %2167 = vmatpush1.msra.mxu0 0.0
        %2168 = vmatprep.subr.mxu0 0.0
        %2169 = vmatpush1.msra.mxu0 0.0
        %2170 = vmatprep.subr.mxu0 0.0
        %2171 = vmatpush1.msra.mxu0 0.0
        %2172 = vmatprep.subr.mxu0 0.0
        %2173 = vmatpush1.msra.mxu0 0.0
        %2174 = vmatprep.subr.mxu0 0.0
        %2175 = vmatpush1.msra.mxu0 0.0
        %2176 = vmatprep.subr.mxu0 0.0
        %2177 = vmatpush1.msra.mxu0 0.0
        %2178 = vmatprep.subr.mxu0 0.0
        %2179 = vmatpush1.msra.mxu0 0.0
        %2180 = vmatprep.subr.mxu0 0.0
        %2181 = vmatpush1.msra.mxu0 0.0
        %2182 = vmatprep.subr.mxu0 0.0
        %2183 = vmatpush1.msra.mxu0 0.0
        %2184 = vmatprep.subr.mxu0 0.0
        %2185 = vmatpush1.msra.mxu0 0.0
        %2186 = vmatprep.subr.mxu0 0.0
        %2187 = vmatpush1.msra.mxu0 0.0
        %2188 = vmatprep.subr.mxu0 0.0
        %2189 = vmatpush1.msra.mxu0 0.0
        %2190 = vmatprep.subr.mxu0 0.0
        %2191 = vmatpush1.msra.mxu0 0.0
        %2192 = vmatprep.subr.mxu0 0.0
        %2193 = vmatpush1.msra.mxu0 0.0
        %2194 = vmatprep.subr.mxu0 0.0
        %2195 = vmatpush1.msra.mxu0 0.0
        %2196 = vmatprep.subr.mxu0 0.0
        %2197 = vmatpush1.msra.mxu0 0.0
        %2198 = vmatprep.subr.mxu0 0.0
        %2199 = vmatpush1.msra.mxu0 0.0
        %2200 = vmatprep.subr.mxu0 0.0
        %2201 = vmatpush1.msra.mxu0 0.0
        %2202 = vmatprep.subr.mxu0 0.0
        %2203 = vmatpush1.msra.mxu0 0.0
        %2204 = vmatprep.mubr.f32.mxu0 0.0
        %2205 = vmatmul.mubr.f32.gmra.mrb[0].mxu0 %v2138
        %v2206 = vpop.f32.mrb[0].mxu0
        %v2207 = vadd.f32 %v2135, %v2206
        %v2208 = vpop.f32.mrb[0].mxu0
        %2209 = vdwg.mxu0
        %v2210 = vadd.f32 %v762, %v2207
        %v2211 = vld [vmem:[%s735] sm:$0x1]
        %v2212 = vld [vmem:[%s738] sm:$0x1]
        %v2213 = vsel %vm765, %v2210, 0.0
        %2214 = vadd.xlane.f32.xlu0 %v2213
        %v2215 = vpop.xlane.xlu0 %2214
        %v2216 = vmul.f32 %v2215, %v769
        %v2217 = vsub.f32 %v2210, %v2216
        %v2218 = vmul.f32 %v2217, %v2217
        %v2219 = vsel %vm765, %v2218, 0.0
        %2220 = vadd.xlane.f32.xlu0 %v2219
        %v2221 = vpop.xlane.xlu0 %2220
        %v2222 = vmul.f32 %v2221, %v769
        %v2223 = vadd.f32 %v2222, 1e-05
        %v2224 = vrsqrt.pop %v2223
        %v2225 = vmul.f32 %v2217, %v2224
        %v2227 = vlaneseq
        %v2228 = vshrl.u32 %v2227, 7
        %v2229 = vsub.s32 0, %v2228
        %v2230 = vrot.slane %v2211, %v2229
        %v2232 = vmul.f32 %v2225, %v2230
        %v2234 = vlaneseq
        %v2235 = vshrl.u32 %v2234, 7
        %v2236 = vsub.s32 0, %v2235
        %v2237 = vrot.slane %v2212, %v2236
        %v2239 = vadd.f32 %v2232, %v2237
        %v2240 = vld [vmem:[%s743] sm:$0xff]
        %v2241 = vld [vmem:[%s743 + $0x8] sm:$0xff]
        %v2242 = vld [vmem:[%s743 + $0x10] sm:$0xff]
        %v2243 = vld [vmem:[%s743 + $0x18] sm:$0xff]
        %v2244 = vld [vmem:[%s746] sm:$0x1]
        %v2246 = vlaneseq
        %v2247 = vshrl.u32 %v2246, 7
        %v2248 = vsub.s32 0, %v2247
        %v2249 = vrot.slane %v2244, %v2248
        %v2252 = vsel %vm765, %v2239, 0
        %2254 = vmatprep.subr.mxu0 0.0
        %2255 = vmatpush1.msra.mxu0 %v2240
        %2256 = vmatprep.subr.mxu0 0.0
        %2257 = vmatpush1.msra.mxu0 %v2241
        %2258 = vmatprep.subr.mxu0 0.0
        %2259 = vmatpush1.msra.mxu0 %v2242
        %2260 = vmatprep.subr.mxu0 0.0
        %2261 = vmatpush1.msra.mxu0 %v2243
        %2262 = vmatprep.subr.mxu0 0.0
        %2263 = vmatpush1.msra.mxu0 0.0
        %2264 = vmatprep.subr.mxu0 0.0
        %2265 = vmatpush1.msra.mxu0 0.0
        %2266 = vmatprep.subr.mxu0 0.0
        %2267 = vmatpush1.msra.mxu0 0.0
        %2268 = vmatprep.subr.mxu0 0.0
        %2269 = vmatpush1.msra.mxu0 0.0
        %2270 = vmatprep.subr.mxu0 0.0
        %2271 = vmatpush1.msra.mxu0 0.0
        %2272 = vmatprep.subr.mxu0 0.0
        %2273 = vmatpush1.msra.mxu0 0.0
        %2274 = vmatprep.subr.mxu0 0.0
        %2275 = vmatpush1.msra.mxu0 0.0
        %2276 = vmatprep.subr.mxu0 0.0
        %2277 = vmatpush1.msra.mxu0 0.0
        %2278 = vmatprep.subr.mxu0 0.0
        %2279 = vmatpush1.msra.mxu0 0.0
        %2280 = vmatprep.subr.mxu0 0.0
        %2281 = vmatpush1.msra.mxu0 0.0
        %2282 = vmatprep.subr.mxu0 0.0
        %2283 = vmatpush1.msra.mxu0 0.0
        %2284 = vmatprep.subr.mxu0 0.0
        %2285 = vmatpush1.msra.mxu0 0.0
        %2286 = vmatprep.subr.mxu0 0.0
        %2287 = vmatpush1.msra.mxu0 0.0
        %2288 = vmatprep.subr.mxu0 0.0
        %2289 = vmatpush1.msra.mxu0 0.0
        %2290 = vmatprep.subr.mxu0 0.0
        %2291 = vmatpush1.msra.mxu0 0.0
        %2292 = vmatprep.subr.mxu0 0.0
        %2293 = vmatpush1.msra.mxu0 0.0
        %2294 = vmatprep.subr.mxu0 0.0
        %2295 = vmatpush1.msra.mxu0 0.0
        %2296 = vmatprep.subr.mxu0 0.0
        %2297 = vmatpush1.msra.mxu0 0.0
        %2298 = vmatprep.subr.mxu0 0.0
        %2299 = vmatpush1.msra.mxu0 0.0
        %2300 = vmatprep.subr.mxu0 0.0
        %2301 = vmatpush1.msra.mxu0 0.0
        %2302 = vmatprep.subr.mxu0 0.0
        %2303 = vmatpush1.msra.mxu0 0.0
        %2304 = vmatprep.subr.mxu0 0.0
        %2305 = vmatpush1.msra.mxu0 0.0
        %2306 = vmatprep.subr.mxu0 0.0
        %2307 = vmatpush1.msra.mxu0 0.0
        %2308 = vmatprep.subr.mxu0 0.0
        %2309 = vmatpush1.msra.mxu0 0.0
        %2310 = vmatprep.subr.mxu0 0.0
        %2311 = vmatpush1.msra.mxu0 0.0
        %2312 = vmatprep.subr.mxu0 0.0
        %2313 = vmatpush1.msra.mxu0 0.0
        %2314 = vmatprep.subr.mxu0 0.0
        %2315 = vmatpush1.msra.mxu0 0.0
        %2316 = vmatprep.subr.mxu0 0.0
        %2317 = vmatpush1.msra.mxu0 0.0
        %2318 = vmatprep.mubr.f32.mxu0 0.0
        %2319 = vmatmul.mubr.f32.gmra.mrb[0].mxu0 %v2252
        %v2320 = vpop.f32.mrb[0].mxu0
        %v2321 = vadd.f32 %v2249, %v2320
        %v2322 = vpop.f32.mrb[0].mxu0
        %2323 = vdwg.mxu0
        %v2324 = vmax.f32 %v2321, 0.0
        %v2325 = vld [vmem:[%s751] sm:$0xff]
        %v2326 = vld [vmem:[%s751 + $0x8] sm:$0xff]
        %v2327 = vld [vmem:[%s751 + $0x10] sm:$0xff]
        %v2328 = vld [vmem:[%s751 + $0x18] sm:$0xff]
        %v2329 = vld [vmem:[%s751 + $0x20] sm:$0xff]
        %v2330 = vld [vmem:[%s751 + $0x28] sm:$0xff]
        %v2331 = vld [vmem:[%s751 + $0x30] sm:$0xff]
        %v2332 = vld [vmem:[%s751 + $0x38] sm:$0xff]
        %v2333 = vld [vmem:[%s754] sm:$0x1]
        %v2335 = vlaneseq
        %v2336 = vshrl.u32 %v2335, 7
        %v2337 = vsub.s32 0, %v2336
        %v2338 = vrot.slane %v2333, %v2337
        %vm2340 = vcmask 523264
        %v2342 = vsel %vm2340, %v2324, 0
        %2344 = vmatprep.subr.mxu0 0.0
        %2345 = vmatpush1.msra.mxu0 %v2325
        %2346 = vmatprep.subr.mxu0 0.0
        %2347 = vmatpush1.msra.mxu0 %v2326
        %2348 = vmatprep.subr.mxu0 0.0
        %2349 = vmatpush1.msra.mxu0 %v2327
        %2350 = vmatprep.subr.mxu0 0.0
        %2351 = vmatpush1.msra.mxu0 %v2328
        %2352 = vmatprep.subr.mxu0 0.0
        %2353 = vmatpush1.msra.mxu0 %v2329
        %2354 = vmatprep.subr.mxu0 0.0
        %2355 = vmatpush1.msra.mxu0 %v2330
        %2356 = vmatprep.subr.mxu0 0.0
        %2357 = vmatpush1.msra.mxu0 %v2331
        %2358 = vmatprep.subr.mxu0 0.0
        %2359 = vmatpush1.msra.mxu0 %v2332
        %2360 = vmatprep.subr.mxu0 0.0
        %2361 = vmatpush1.msra.mxu0 0.0
        %2362 = vmatprep.subr.mxu0 0.0
        %2363 = vmatpush1.msra.mxu0 0.0
        %2364 = vmatprep.subr.mxu0 0.0
        %2365 = vmatpush1.msra.mxu0 0.0
        %2366 = vmatprep.subr.mxu0 0.0
        %2367 = vmatpush1.msra.mxu0 0.0
        %2368 = vmatprep.subr.mxu0 0.0
        %2369 = vmatpush1.msra.mxu0 0.0
        %2370 = vmatprep.subr.mxu0 0.0
        %2371 = vmatpush1.msra.mxu0 0.0
        %2372 = vmatprep.subr.mxu0 0.0
        %2373 = vmatpush1.msra.mxu0 0.0
        %2374 = vmatprep.subr.mxu0 0.0
        %2375 = vmatpush1.msra.mxu0 0.0
        %2376 = vmatprep.subr.mxu0 0.0
        %2377 = vmatpush1.msra.mxu0 0.0
        %2378 = vmatprep.subr.mxu0 0.0
        %2379 = vmatpush1.msra.mxu0 0.0
        %2380 = vmatprep.subr.mxu0 0.0
        %2381 = vmatpush1.msra.mxu0 0.0
        %2382 = vmatprep.subr.mxu0 0.0
        %2383 = vmatpush1.msra.mxu0 0.0
        %2384 = vmatprep.subr.mxu0 0.0
        %2385 = vmatpush1.msra.mxu0 0.0
        %2386 = vmatprep.subr.mxu0 0.0
        %2387 = vmatpush1.msra.mxu0 0.0
        %2388 = vmatprep.subr.mxu0 0.0
        %2389 = vmatpush1.msra.mxu0 0.0
        %2390 = vmatprep.subr.mxu0 0.0
        %2391 = vmatpush1.msra.mxu0 0.0
        %2392 = vmatprep.subr.mxu0 0.0
        %2393 = vmatpush1.msra.mxu0 0.0
        %2394 = vmatprep.subr.mxu0 0.0
        %2395 = vmatpush1.msra.mxu0 0.0
        %2396 = vmatprep.subr.mxu0 0.0
        %2397 = vmatpush1.msra.mxu0 0.0
        %2398 = vmatprep.subr.mxu0 0.0
        %2399 = vmatpush1.msra.mxu0 0.0
        %2400 = vmatprep.subr.mxu0 0.0
        %2401 = vmatpush1.msra.mxu0 0.0
        %2402 = vmatprep.subr.mxu0 0.0
        %2403 = vmatpush1.msra.mxu0 0.0
        %2404 = vmatprep.subr.mxu0 0.0
        %2405 = vmatpush1.msra.mxu0 0.0
        %2406 = vmatprep.subr.mxu0 0.0
        %2407 = vmatpush1.msra.mxu0 0.0
        %2408 = vmatprep.mubr.f32.mxu0 0.0
        %2409 = vmatmul.mubr.f32.gmra.mrb[0].mxu0 %v2342
        %v2410 = vpop.f32.mrb[0].mxu0
        %v2411 = vadd.f32 %v2338, %v2410
        %v2412 = vpop.f32.mrb[0].mxu0
        %2413 = vdwg.mxu0
        %v2414 = vadd.f32 %v2210, %v2411
        %2415 = vst.msk [vmem:[#allocation2] sm:$0xff] %vm765, %v2414
        %p2416 = scmp.eq.s32.totalorder %s38, 1
        // Predicated region
        $region93: #{tpu_custom_call.1} parent=83 // pred_check
          %p2417 = pneg %p2416
        $region94: #{tpu_custom_call.1} parent=83 // pred_check_branch
          %2419 = sbr.rel (%p2417) target = $region96
        $region95: #{tpu_custom_call.1} parent=83 // pred_region
          %v2420 = vld [vmem:[%s14] sm:$0x1]
          %v2421 = vld [vmem:[%s15] sm:$0x1]
          %v2422 = vsel %vm765, %v2414, 0.0
          %2423 = vadd.xlane.f32.xlu0 %v2422
          %v2424 = vpop.xlane.xlu0 %2423
          %v2425 = vmul.f32 %v2424, %v769
          %v2426 = vsub.f32 %v2414, %v2425
          %v2427 = vmul.f32 %v2426, %v2426
          %v2428 = vsel %vm765, %v2427, 0.0
          %2429 = vadd.xlane.f32.xlu0 %v2428
          %v2430 = vpop.xlane.xlu0 %2429
          %v2431 = vmul.f32 %v2430, %v769
          %v2432 = vadd.f32 %v2431, 1e-05
          %v2433 = vrsqrt.pop %v2432
          %v2434 = vmul.f32 %v2426, %v2433
          %v2436 = vlaneseq
          %v2437 = vshrl.u32 %v2436, 7
          %v2438 = vsub.s32 0, %v2437
          %v2439 = vrot.slane %v2420, %v2438
          %v2441 = vmul.f32 %v2434, %v2439
          %v2443 = vlaneseq
          %v2444 = vshrl.u32 %v2443, 7
          %v2445 = vsub.s32 0, %v2444
          %v2446 = vrot.slane %v2421, %v2445
          %v2448 = vadd.f32 %v2441, %v2446
          %2449 = vst.msk [vmem:[%s707] sm:$0xff] %vm765, %v2448
        $region96: #{tpu_custom_call.1} parent=83 // pred_fallthru
          _
        %s2450 = sand.u32 %s459, 1
        %s2451 = scalar_lea.sflag [#allocation5], %s2450
        %s2452 = sand.u32 %s459, 1
        %s2453 = smul.addr %s2452, 8
        %s2454 = scalar_lea.vmem [#allocation6], %s2453
        // Predicated region
        $region97: #{tpu_custom_call.1} parent=83 // pred_check
          %p2455 = pneg %p469
        $region98: #{tpu_custom_call.1} parent=83 // pred_check_branch
          %2457 = sbr.rel (%p2455) target = $region100
        $region99: #{tpu_custom_call.1} parent=83 // pred_region
          %s2459 = ssub.s32 128, 128
          %2460 = vsyncadd %s2451, %s2459
          %s2461 = smul.addr %s37, 128
          %s2462 = scalar_lea.hbm %s16, %s2461
          %s2464 = sshll.u32 %s2454, 4
          %s2465 = int_to_ptr.vmem [resolvable:$true] %s2464
          %2467 = dma.vmem_to_hbm [thread:$0]  %s2465, 128, %s2462, %s2451
        $region100: #{tpu_custom_call.1} parent=83 // pred_fallthru
          _
      $region84: #{tpu_custom_call.1} parent=5 // pred_fallthru
        _
      %p2468 = scmp.le.s32.totalorder 2, %s28
      // Predicated region
      $region101: #{tpu_custom_call.1} parent=5 // pred_check
        %p2469 = pneg %p2468
      $region102: #{tpu_custom_call.1} parent=5 // pred_check_branch
        %2471 = sbr.rel (%p2469) target = $region104
      $region103: #{tpu_custom_call.1} parent=5 // pred_region
        %s2472 = ssub.s32 %s28, 2
        // Predicated region
        $region105: #{tpu_custom_call.1} parent=103 // pred_check
          %p2473 = pneg %p475
        $region106: #{tpu_custom_call.1} parent=103 // pred_check_branch
          %2475 = sbr.rel (%p2473) target = $region108
        $region107: #{tpu_custom_call.1} parent=103 // pred_region
          %s2476 = sand.u32 %s460, 1
          %s2477 = scalar_lea.sflag [#allocation5], %s2476
          %s2478 = sand.u32 %s460, 1
          %s2479 = smul.addr %s2478, 8
          %s2480 = scalar_lea.vmem [#allocation6], %s2479
          %2481 = dma.done %s2477, 128
        $region108: #{tpu_custom_call.1} parent=103 // pred_fallthru
          _
      $region104: #{tpu_custom_call.1} parent=5 // pred_fallthru
        _
    $region6: #{tpu_custom_call.1} parent=1 // loop_footer
      %s32 = sadd.s32 1, %s28
    $region7: #{tpu_custom_call.1} parent=1 // loop_footer_branch
      %27 = sbr.rel target = $region3
    $region8: #{tpu_custom_call.1} parent=1 // loop_exit
      _
    %2482 = vsyncpa [#allocation4], 1
    %s2483 = scalar_lea.sflag [#allocation4], 1
    %2484 = vsyncpa %s2483, 1
    %2485 = vsyncpa [#allocation5], 1
    %s2486 = scalar_lea.sflag [#allocation5], 1
    %2487 = vsyncpa %s2486, 1

</llo_original>
